<compile_context>
chip_gen: v7x
topology: tpu7x:2x2x1
jax: 0.10.0
libtpu: 0.0.40
codegen_flags: <defaults>
</compile_context>

<pallas_src>
import functools

import jax
import jax.numpy as jnp
from jax import lax
from jax.experimental import pallas as pl
from jax.experimental.pallas import tpu as pltpu


def _round_up(x, m):
    return (x + m - 1) // m * m


def _border_masks(N, H, W):
    """(1, N*H*W) boolean border masks; static functions of the lane index."""
    NHW = N * H * W
    p = lax.broadcasted_iota(jnp.int32, (1, NHW), 1)
    if W & (W - 1) == 0:                       # avoid integer % on the VPU
        x = p & (W - 1)
        yq = p >> (W.bit_length() - 1)
    else:
        x = p % W
        yq = p // W
    y = (yq & (H - 1)) if (H & (H - 1)) == 0 else (yq % H)
    return {"top": y != 0, "bot": y != (H - 1),
            "left": x != 0, "right": x != (W - 1)}


def _fused_generator_kernel(x_ref, w1_ref, w2_ref, b2_ref, o_ref,
                            row_ref, col_ref, *, N, Cin, Chid, H, W, Cp, LPAD):
    """Single-step fused generator: conv3x3 + bias + ReLU + conv3x3 + bias.

    x_ref:   (N, Cin, H*W)               channels on sublanes, pixels on lanes
    w1_ref:  (Chid, 9*Cp)                columns (dy, dx, padded cin); the
                                         (center-tap, cin=Cin) column carries b1
    w2_ref:  (Cout, 9*Cp)
    b2_ref:  (Cout, 1)
    o_ref:   (N, Cout, H*W)
    row_ref: (Cp, LPAD + N*H*W + LPAD)   flat row buffer, lane-aligned interior
    col_ref: (9*Cp, N*H*W)               im2col matrix, shared by both layers
    """
    HW = H * W
    NHW = N * HW

    # --- hoisted border masks (computed once, shared by both im2col passes; the
    #     y-masks also stop vertical taps bleeding across batch-folded images) ---
    m = _border_masks(N, H, W)
    tap_mask = {}
    for dy in range(3):
        for dx in range(3):
            mm = None
            if dy == 0:
                mm = m["top"]
            elif dy == 2:
                mm = m["bot"]
            if dx == 0:
                mm = m["left"] if mm is None else (mm & m["left"])
            elif dx == 2:
                mm = m["right"] if mm is None else (mm & m["right"])
            tap_mask[(dy, dx)] = mm            # None for the centre tap

    def im2col():
        # 9 taps: misaligned *loads* from the row buffer, VPU-masked, written as
        # clean (8,128)-tile stores into the shared im2col matrix.
        for dy in range(3):
            for dx in range(3):
                off = (dy - 1) * W + (dx - 1)
                tap = row_ref[:, LPAD + off:LPAD + off + NHW]
                mm = tap_mask[(dy, dx)]
                if mm is not None:
                    tap = jnp.where(mm, tap, 0.0)
                t = dy * 3 + dx
                col_ref[t * Cp:(t + 1) * Cp, :] = tap

    # --- zero only the two edge regions (once); the interior is always fully
    #     overwritten and masked taps never depend on edge contents ---
    row_ref[:, 0:LPAD] = jnp.zeros((Cp, LPAD), jnp.float32)
    row_ref[:, LPAD + NHW:LPAD + NHW + LPAD] = jnp.zeros((Cp, LPAD), jnp.float32)

    # --- layer-1 input slab: batch folded onto lanes; channel index Cin is an
    #     all-ones row so b1 rides along as one extra matmul column ---
    for n in range(N):
        row_ref[0:Cin, LPAD + n * HW:LPAD + (n + 1) * HW] = x_ref[n]
    row_ref[Cin:Cin + 1, LPAD:LPAD + NHW] = jnp.ones((1, NHW), jnp.float32)
    if Cp > Cin + 1:
        row_ref[Cin + 1:Cp, LPAD:LPAD + NHW] = jnp.zeros((Cp - Cin - 1, NHW),
                                                         jnp.float32)

    # conv1 + bias + ReLU: ONE MXU matmul (K = 9*Cp), bias folded into w1m
    im2col()
    h = jnp.dot(w1_ref[...], col_ref[...], preferred_element_type=jnp.float32)
    h = jnp.maximum(h, 0.0)                                     # (Chid, N*H*W)

    # conv2 + bias: hidden activation never leaves VMEM; row/col scratch reused
    row_ref[0:Chid, LPAD:LPAD + NHW] = h
    if Chid < Cp:
        row_ref[Chid:Cp, LPAD:LPAD + NHW] = jnp.zeros((Cp - Chid, NHW), jnp.float32)
    im2col()
    y = jnp.dot(w2_ref[...], col_ref[...], preferred_element_type=jnp.float32)
    y = y + b2_ref[...]

    for n in range(N):                                          # lane-dense stores
        o_ref[n] = y[:, n * HW:(n + 1) * HW].astype(o_ref.dtype)


def _fused_generator_forward(x_nchw, w1m, w2m, b2m):
    """x_nchw: (N, Cin, H, W); w*m: (Cout, 9*Cp) matmul-layout weights."""
    N, Cin, H, W = x_nchw.shape
    Chid = w1m.shape[0]
    Cout = w2m.shape[0]
    Cp = w1m.shape[1] // 9
    HW, NHW = H * W, N * H * W
    LPAD = _round_up(W + 1, 128)             # lane-aligned interior offset (>= W+1)

    x_flat = x_nchw.reshape(N, Cin, HW)      # free reshape; no transpose/pad in HBM

    kernel = functools.partial(_fused_generator_kernel, N=N, Cin=Cin, Chid=Chid,
                               H=H, W=W, Cp=Cp, LPAD=LPAD)
    out = pl.pallas_call(
        kernel,
        out_shape=jax.ShapeDtypeStruct((N, Cout, HW), x_nchw.dtype),
        grid_spec=pltpu.PrefetchScalarGridSpec(
            num_scalar_prefetch=0,
            grid=(1,),                       # single step: whole generator fused
            in_specs=[
                pl.BlockSpec((N, Cin, HW), lambda i: (0, 0, 0)),
                pl.BlockSpec((Chid, 9 * Cp), lambda i: (0, 0)),
                pl.BlockSpec((Cout, 9 * Cp), lambda i: (0, 0)),
                pl.BlockSpec((Cout, 1), lambda i: (0, 0)),
            ],
            out_specs=pl.BlockSpec((N, Cout, HW), lambda i: (0, 0, 0)),
            scratch_shapes=[
                pltpu.VMEM((Cp, LPAD + NHW + LPAD), jnp.float32),  # flat row buffer
                pltpu.VMEM((9 * Cp, NHW), jnp.float32),            # shared im2col
            ],
        ),
        compiler_params=pltpu.CompilerParams(
            dimension_semantics=("arbitrary",)),
    )(x_flat, w1m, w2m, b2m)
    # (N, Cout, H*W) -> NCHW is a free reshape (no transpose needed).
    return out.reshape(N, Cout, H, W)


_fused_generator_forward_jit = jax.jit(_fused_generator_forward)


def _fold_conv3x3(w_hwio, cp, bias=None, bias_col=None):
    """(3,3,Cin,Cout) HWIO -> (Cout, 9*cp) matmul layout, columns (dy, dx, cin);
    optionally folds a bias vector into the centre-tap column `bias_col`."""
    _, _, cin, cout = w_hwio.shape
    wm = jnp.zeros((cout, 9 * cp), jnp.float32)
    for dy in range(3):
        for dx in range(3):
            t = dy * 3 + dx
            wm = wm.at[:, t * cp:t * cp + cin].set(w_hwio[dy, dx].T)
    if bias is not None:
        wm = wm.at[:, 4 * cp + bias_col].set(bias)     # centre tap, ones channel
    return wm


class CustomModelPallas:
    """JAX/Pallas port of CustomModel.forward (the generator hot path)."""

    def __init__(self, c_in=4, c_hid=8, key=jax.random.PRNGKey(0)):
        k1, k2, k3, k4 = jax.random.split(key, 4)
        # Deterministic synthetic generator parameters (HWIO layout, matches the
        # lax.conv reference).  Stands in for model_module.build_model(config).
        self.w1 = jax.random.normal(k1, (3, 3, c_in, c_hid), jnp.float32) * 0.1
        self.b1 = jax.random.normal(k2, (c_hid,), jnp.float32) * 0.1
        self.w2 = jax.random.normal(k3, (3, 3, c_hid, c_in), jnp.float32) * 0.1
        self.b2 = jax.random.normal(k4, (c_in,), jnp.float32) * 0.1

        # Per-tap sublane block: multiple of 8 rows, with room for the ones row
        # that folds b1 into the conv1 matmul (sublane-aligned im2col stores).
        cp = max(_round_up(c_in + 1, 8), _round_up(c_hid, 8))
        self.w1m = _fold_conv3x3(self.w1, cp, bias=self.b1, bias_col=c_in)
        self.w2m = _fold_conv3x3(self.w2, cp)
        self.b2m = self.b2.reshape(c_in, 1)
        # TODO(synk): load_model / save_model / find_latest_epoch (checkpoint I/O),
        # setup_parallel / synchronize_models (DDP), display(), and the optional
        # adversarial Discriminator are host-side infrastructure with no Pallas
        # equivalent.

    def __call__(self, x_nchw):
        return _fused_generator_forward_jit(x_nchw, self.w1m, self.w2m, self.b2m)


def _reference_forward(model, x_nchw):
    """Pure-JAX reference (lax.conv) for correctness checking."""
    def conv(x, w, b):
        y = lax.conv_general_dilated(
            x, w, window_strides=(1, 1), padding="SAME",
            dimension_numbers=("NCHW", "HWIO", "NCHW"))
        return y + b.reshape(1, -1, 1, 1)

    h = jnp.maximum(conv(x_nchw, model.w1, model.b1), 0.0)
    return conv(h, model.w2, model.b2)


if __name__ == "__main__":
    key = jax.random.PRNGKey(0)
    k_in, k_param = jax.random.split(key)

    N, C, H, W = 2, 4, 16, 16
    x = jax.random.normal(k_in, (N, C, H, W), jnp.float32)

    model = CustomModelPallas(c_in=C, c_hid=8, key=k_param)

    out = jax.block_until_ready(model(x))
    ref = jax.block_until_ready(_reference_forward(model, x))

    assert out.shape == (N, C, H, W)
    assert jnp.allclose(out, ref, rtol=1e-3, atol=1e-3), "mismatch vs lax.conv reference"

    print("KERNEL_OK")
</pallas_src>

<mosaic_0001>
module attributes {stable_mosaic.version = 11 : i64} {
  func.func @_fused_generator_kernel(%arg0: i32, %arg1: memref<2x4x256xf32, #tpu.memory_space<vmem>>, %arg2: memref<8x72xf32, #tpu.memory_space<vmem>>, %arg3: memref<4x72xf32, #tpu.memory_space<vmem>>, %arg4: memref<4x1xf32, #tpu.memory_space<vmem>>, %arg5: memref<2x4x256xf32, #tpu.memory_space<vmem>>, %arg6: memref<8x768xf32, #tpu.memory_space<vmem>>, %arg7: memref<72x512xf32, #tpu.memory_space<vmem>>) attributes {dimension_semantics = [#tpu.dimension_semantics<arbitrary>], iteration_bounds = array<i64: 1>, scalar_prefetch = 0 : i64, scratch_operands = 2 : i64, tpu.core_type = #tpu.core_type<tc>, window_params = [{pipeline_mode = #tpu.pipeline_mode<synchronous>, transform_indices = @transform_0, window_bounds = array<i64: 2, 4, 256>}, {pipeline_mode = #tpu.pipeline_mode<synchronous>, transform_indices = @transform_1, window_bounds = array<i64: 8, 72>}, {pipeline_mode = #tpu.pipeline_mode<synchronous>, transform_indices = @transform_2, window_bounds = array<i64: 4, 72>}, {pipeline_mode = #tpu.pipeline_mode<synchronous>, transform_indices = @transform_3, window_bounds = array<i64: 4, 1>}, {pipeline_mode = #tpu.pipeline_mode<synchronous>, transform_indices = @transform_4, window_bounds = array<i64: 2, 4, 256>}]} {
    %0 = tpu.iota {dimensions = array<i32: 1>} : vector<1x512xi32>
    %c15_i32 = arith.constant 15 : i32
    %1 = vector.broadcast %c15_i32 : i32 to vector<1x512xi32>
    %2 = arith.andi %0, %1 : vector<1x512xi32>
    %c4_i32 = arith.constant 4 : i32
    %3 = vector.broadcast %c4_i32 : i32 to vector<1x512xi32>
    %4 = arith.shrsi %0, %3 : vector<1x512xi32>
    %c15_i32_0 = arith.constant 15 : i32
    %5 = vector.broadcast %c15_i32_0 : i32 to vector<1x512xi32>
    %6 = arith.andi %4, %5 : vector<1x512xi32>
    %c0_i32 = arith.constant 0 : i32
    %7 = vector.broadcast %c0_i32 : i32 to vector<1x512xi32>
    %8 = arith.cmpi ne, %6, %7 : vector<1x512xi32>
    %c15_i32_1 = arith.constant 15 : i32
    %9 = vector.broadcast %c15_i32_1 : i32 to vector<1x512xi32>
    %10 = arith.cmpi ne, %6, %9 : vector<1x512xi32>
    %c0_i32_2 = arith.constant 0 : i32
    %11 = vector.broadcast %c0_i32_2 : i32 to vector<1x512xi32>
    %12 = arith.cmpi ne, %2, %11 : vector<1x512xi32>
    %c15_i32_3 = arith.constant 15 : i32
    %13 = vector.broadcast %c15_i32_3 : i32 to vector<1x512xi32>
    %14 = arith.cmpi ne, %2, %13 : vector<1x512xi32>
    %15 = arith.andi %8, %12 : vector<1x512xi1>
    %16 = arith.andi %8, %14 : vector<1x512xi1>
    %17 = arith.andi %10, %12 : vector<1x512xi1>
    %18 = arith.andi %10, %14 : vector<1x512xi1>
    %cst = arith.constant 0.000000e+00 : f32
    %19 = vector.broadcast %cst : f32 to vector<8x128xf32>
    %c0 = arith.constant 0 : index
    %c0_4 = arith.constant 0 : index
    %20 = vector.load %arg6[%c0, %c0_4] : memref<8x768xf32, #tpu.memory_space<vmem>>, vector<8x128xf32>
    tpu.vector_store %arg6[%c0, %c0_4], %19 {strides = array<i32>} : memref<8x768xf32, #tpu.memory_space<vmem>>, vector<8x128xf32>,
    %cst_5 = arith.constant 0.000000e+00 : f32
    %21 = vector.broadcast %cst_5 : f32 to vector<8x128xf32>
    %c0_6 = arith.constant 0 : index
    %c640 = arith.constant 640 : index
    %22 = vector.load %arg6[%c0_6, %c640] : memref<8x768xf32, #tpu.memory_space<vmem>>, vector<8x128xf32>
    tpu.vector_store %arg6[%c0_6, %c640], %21 {strides = array<i32>} : memref<8x768xf32, #tpu.memory_space<vmem>>, vector<8x128xf32>,
    %c0_7 = arith.constant 0 : index
    %c0_8 = arith.constant 0 : index
    %c0_9 = arith.constant 0 : index
    %23 = vector.load %arg1[%c0_7, %c0_8, %c0_9] : memref<2x4x256xf32, #tpu.memory_space<vmem>>, vector<1x4x256xf32>
    %24 = vector.shape_cast %23 : vector<1x4x256xf32> to vector<4x256xf32>
    %c0_10 = arith.constant 0 : index
    %c128 = arith.constant 128 : index
    %25 = vector.load %arg6[%c0_10, %c128] : memref<8x768xf32, #tpu.memory_space<vmem>>, vector<4x256xf32>
    tpu.vector_store %arg6[%c0_10, %c128], %24 {strides = array<i32>} : memref<8x768xf32, #tpu.memory_space<vmem>>, vector<4x256xf32>,
    %c1 = arith.constant 1 : index
    %c0_11 = arith.constant 0 : index
    %c0_12 = arith.constant 0 : index
    %26 = vector.load %arg1[%c1, %c0_11, %c0_12] : memref<2x4x256xf32, #tpu.memory_space<vmem>>, vector<1x4x256xf32>
    %27 = vector.shape_cast %26 : vector<1x4x256xf32> to vector<4x256xf32>
    %c0_13 = arith.constant 0 : index
    %c384 = arith.constant 384 : index
    %28 = vector.load %arg6[%c0_13, %c384] : memref<8x768xf32, #tpu.memory_space<vmem>>, vector<4x256xf32>
    tpu.vector_store %arg6[%c0_13, %c384], %27 {strides = array<i32>} : memref<8x768xf32, #tpu.memory_space<vmem>>, vector<4x256xf32>,
    %cst_14 = arith.constant 1.000000e+00 : f32
    %29 = vector.broadcast %cst_14 : f32 to vector<1x512xf32>
    %c4 = arith.constant 4 : index
    %c128_15 = arith.constant 128 : index
    %30 = vector.load %arg6[%c4, %c128_15] : memref<8x768xf32, #tpu.memory_space<vmem>>, vector<1x512xf32>
    tpu.vector_store %arg6[%c4, %c128_15], %29 {strides = array<i32>} : memref<8x768xf32, #tpu.memory_space<vmem>>, vector<1x512xf32>,
    %cst_16 = arith.constant 0.000000e+00 : f32
    %31 = vector.broadcast %cst_16 : f32 to vector<3x512xf32>
    %c5 = arith.constant 5 : index
    %c128_17 = arith.constant 128 : index
    %32 = vector.load %arg6[%c5, %c128_17] : memref<8x768xf32, #tpu.memory_space<vmem>>, vector<3x512xf32>
    tpu.vector_store %arg6[%c5, %c128_17], %31 {strides = array<i32>} : memref<8x768xf32, #tpu.memory_space<vmem>>, vector<3x512xf32>,
    %c0_18 = arith.constant 0 : index
    %c111 = arith.constant 111 : index
    %33 = vector.load %arg6[%c0_18, %c111] : memref<8x768xf32, #tpu.memory_space<vmem>>, vector<8x512xf32>
    %cst_19 = arith.constant 0.000000e+00 : f32
    %34 = vector.shape_cast %15 : vector<1x512xi1> to vector<1x512xi1>
    %35 = vector.broadcast %34 : vector<1x512xi1> to vector<8x512xi1>
    %36 = vector.broadcast %cst_19 : f32 to vector<8x512xf32>
    %37 = arith.select %35, %33, %36 : vector<8x512xi1>, vector<8x512xf32>
    %c0_20 = arith.constant 0 : index
    %c0_21 = arith.constant 0 : index
    %38 = vector.load %arg7[%c0_20, %c0_21] : memref<72x512xf32, #tpu.memory_space<vmem>>, vector<8x512xf32>
    tpu.vector_store %arg7[%c0_20, %c0_21], %37 {strides = array<i32>} : memref<72x512xf32, #tpu.memory_space<vmem>>, vector<8x512xf32>,
    %c0_22 = arith.constant 0 : index
    %c112 = arith.constant 112 : index
    %39 = vector.load %arg6[%c0_22, %c112] : memref<8x768xf32, #tpu.memory_space<vmem>>, vector<8x512xf32>
    %cst_23 = arith.constant 0.000000e+00 : f32
    %40 = vector.shape_cast %8 : vector<1x512xi1> to vector<1x512xi1>
    %41 = vector.broadcast %40 : vector<1x512xi1> to vector<8x512xi1>
    %42 = vector.broadcast %cst_23 : f32 to vector<8x512xf32>
    %43 = arith.select %41, %39, %42 : vector<8x512xi1>, vector<8x512xf32>
    %c8 = arith.constant 8 : index
    %c0_24 = arith.constant 0 : index
    %44 = vector.load %arg7[%c8, %c0_24] : memref<72x512xf32, #tpu.memory_space<vmem>>, vector<8x512xf32>
    tpu.vector_store %arg7[%c8, %c0_24], %43 {strides = array<i32>} : memref<72x512xf32, #tpu.memory_space<vmem>>, vector<8x512xf32>,
    %c0_25 = arith.constant 0 : index
    %c113 = arith.constant 113 : index
    %45 = vector.load %arg6[%c0_25, %c113] : memref<8x768xf32, #tpu.memory_space<vmem>>, vector<8x512xf32>
    %cst_26 = arith.constant 0.000000e+00 : f32
    %46 = vector.shape_cast %16 : vector<1x512xi1> to vector<1x512xi1>
    %47 = vector.broadcast %46 : vector<1x512xi1> to vector<8x512xi1>
    %48 = vector.broadcast %cst_26 : f32 to vector<8x512xf32>
    %49 = arith.select %47, %45, %48 : vector<8x512xi1>, vector<8x512xf32>
    %c16 = arith.constant 16 : index
    %c0_27 = arith.constant 0 : index
    %50 = vector.load %arg7[%c16, %c0_27] : memref<72x512xf32, #tpu.memory_space<vmem>>, vector<8x512xf32>
    tpu.vector_store %arg7[%c16, %c0_27], %49 {strides = array<i32>} : memref<72x512xf32, #tpu.memory_space<vmem>>, vector<8x512xf32>,
    %c0_28 = arith.constant 0 : index
    %c127 = arith.constant 127 : index
    %51 = vector.load %arg6[%c0_28, %c127] : memref<8x768xf32, #tpu.memory_space<vmem>>, vector<8x512xf32>
    %cst_29 = arith.constant 0.000000e+00 : f32
    %52 = vector.shape_cast %12 : vector<1x512xi1> to vector<1x512xi1>
    %53 = vector.broadcast %52 : vector<1x512xi1> to vector<8x512xi1>
    %54 = vector.broadcast %cst_29 : f32 to vector<8x512xf32>
    %55 = arith.select %53, %51, %54 : vector<8x512xi1>, vector<8x512xf32>
    %c24 = arith.constant 24 : index
    %c0_30 = arith.constant 0 : index
    %56 = vector.load %arg7[%c24, %c0_30] : memref<72x512xf32, #tpu.memory_space<vmem>>, vector<8x512xf32>
    tpu.vector_store %arg7[%c24, %c0_30], %55 {strides = array<i32>} : memref<72x512xf32, #tpu.memory_space<vmem>>, vector<8x512xf32>,
    %c0_31 = arith.constant 0 : index
    %c128_32 = arith.constant 128 : index
    %57 = vector.load %arg6[%c0_31, %c128_32] : memref<8x768xf32, #tpu.memory_space<vmem>>, vector<8x512xf32>
    %c32 = arith.constant 32 : index
    %c0_33 = arith.constant 0 : index
    %58 = vector.load %arg7[%c32, %c0_33] : memref<72x512xf32, #tpu.memory_space<vmem>>, vector<8x512xf32>
    tpu.vector_store %arg7[%c32, %c0_33], %57 {strides = array<i32>} : memref<72x512xf32, #tpu.memory_space<vmem>>, vector<8x512xf32>,
    %c0_34 = arith.constant 0 : index
    %c129 = arith.constant 129 : index
    %59 = vector.load %arg6[%c0_34, %c129] : memref<8x768xf32, #tpu.memory_space<vmem>>, vector<8x512xf32>
    %cst_35 = arith.constant 0.000000e+00 : f32
    %60 = vector.shape_cast %14 : vector<1x512xi1> to vector<1x512xi1>
    %61 = vector.broadcast %60 : vector<1x512xi1> to vector<8x512xi1>
    %62 = vector.broadcast %cst_35 : f32 to vector<8x512xf32>
    %63 = arith.select %61, %59, %62 : vector<8x512xi1>, vector<8x512xf32>
    %c40 = arith.constant 40 : index
    %c0_36 = arith.constant 0 : index
    %64 = vector.load %arg7[%c40, %c0_36] : memref<72x512xf32, #tpu.memory_space<vmem>>, vector<8x512xf32>
    tpu.vector_store %arg7[%c40, %c0_36], %63 {strides = array<i32>} : memref<72x512xf32, #tpu.memory_space<vmem>>, vector<8x512xf32>,
    %c0_37 = arith.constant 0 : index
    %c143 = arith.constant 143 : index
    %65 = vector.load %arg6[%c0_37, %c143] : memref<8x768xf32, #tpu.memory_space<vmem>>, vector<8x512xf32>
    %cst_38 = arith.constant 0.000000e+00 : f32
    %66 = vector.shape_cast %17 : vector<1x512xi1> to vector<1x512xi1>
    %67 = vector.broadcast %66 : vector<1x512xi1> to vector<8x512xi1>
    %68 = vector.broadcast %cst_38 : f32 to vector<8x512xf32>
    %69 = arith.select %67, %65, %68 : vector<8x512xi1>, vector<8x512xf32>
    %c48 = arith.constant 48 : index
    %c0_39 = arith.constant 0 : index
    %70 = vector.load %arg7[%c48, %c0_39] : memref<72x512xf32, #tpu.memory_space<vmem>>, vector<8x512xf32>
    tpu.vector_store %arg7[%c48, %c0_39], %69 {strides = array<i32>} : memref<72x512xf32, #tpu.memory_space<vmem>>, vector<8x512xf32>,
    %c0_40 = arith.constant 0 : index
    %c144 = arith.constant 144 : index
    %71 = vector.load %arg6[%c0_40, %c144] : memref<8x768xf32, #tpu.memory_space<vmem>>, vector<8x512xf32>
    %cst_41 = arith.constant 0.000000e+00 : f32
    %72 = vector.shape_cast %10 : vector<1x512xi1> to vector<1x512xi1>
    %73 = vector.broadcast %72 : vector<1x512xi1> to vector<8x512xi1>
    %74 = vector.broadcast %cst_41 : f32 to vector<8x512xf32>
    %75 = arith.select %73, %71, %74 : vector<8x512xi1>, vector<8x512xf32>
    %c56 = arith.constant 56 : index
    %c0_42 = arith.constant 0 : index
    %76 = vector.load %arg7[%c56, %c0_42] : memref<72x512xf32, #tpu.memory_space<vmem>>, vector<8x512xf32>
    tpu.vector_store %arg7[%c56, %c0_42], %75 {strides = array<i32>} : memref<72x512xf32, #tpu.memory_space<vmem>>, vector<8x512xf32>,
    %c0_43 = arith.constant 0 : index
    %c145 = arith.constant 145 : index
    %77 = vector.load %arg6[%c0_43, %c145] : memref<8x768xf32, #tpu.memory_space<vmem>>, vector<8x512xf32>
    %cst_44 = arith.constant 0.000000e+00 : f32
    %78 = vector.shape_cast %18 : vector<1x512xi1> to vector<1x512xi1>
    %79 = vector.broadcast %78 : vector<1x512xi1> to vector<8x512xi1>
    %80 = vector.broadcast %cst_44 : f32 to vector<8x512xf32>
    %81 = arith.select %79, %77, %80 : vector<8x512xi1>, vector<8x512xf32>
    %c64 = arith.constant 64 : index
    %c0_45 = arith.constant 0 : index
    %82 = vector.load %arg7[%c64, %c0_45] : memref<72x512xf32, #tpu.memory_space<vmem>>, vector<8x512xf32>
    tpu.vector_store %arg7[%c64, %c0_45], %81 {strides = array<i32>} : memref<72x512xf32, #tpu.memory_space<vmem>>, vector<8x512xf32>,
    %c0_46 = arith.constant 0 : index
    %c0_47 = arith.constant 0 : index
    %83 = vector.load %arg2[%c0_46, %c0_47] : memref<8x72xf32, #tpu.memory_space<vmem>>, vector<8x72xf32>
    %c0_48 = arith.constant 0 : index
    %c0_49 = arith.constant 0 : index
    %84 = vector.load %arg7[%c0_48, %c0_49] : memref<72x512xf32, #tpu.memory_space<vmem>>, vector<72x512xf32>
    %cst_50 = arith.constant dense<0.000000e+00> : vector<8x512xf32>
    %85 = tpu.matmul %83, %84, %cst_50 {dimension_numbers = #tpu.dot_dimension_numbers<[1], [0], [0], [1], [0, 0, 1, 1], [], []>} : vector<8x72xf32>, vector<72x512xf32>, vector<8x512xf32> -> vector<8x512xf32>
    %cst_51 = arith.constant 0.000000e+00 : f32
    %86 = vector.broadcast %cst_51 : f32 to vector<8x512xf32>
    %87 = arith.maximumf %85, %86 : vector<8x512xf32>
    %c0_52 = arith.constant 0 : index
    %c128_53 = arith.constant 128 : index
    %88 = vector.load %arg6[%c0_52, %c128_53] : memref<8x768xf32, #tpu.memory_space<vmem>>, vector<8x512xf32>
    tpu.vector_store %arg6[%c0_52, %c128_53], %87 {strides = array<i32>} : memref<8x768xf32, #tpu.memory_space<vmem>>, vector<8x512xf32>,
    %c0_54 = arith.constant 0 : index
    %c111_55 = arith.constant 111 : index
    %89 = vector.load %arg6[%c0_54, %c111_55] : memref<8x768xf32, #tpu.memory_space<vmem>>, vector<8x512xf32>
    %cst_56 = arith.constant 0.000000e+00 : f32
    %90 = vector.shape_cast %15 : vector<1x512xi1> to vector<1x512xi1>
    %91 = vector.broadcast %90 : vector<1x512xi1> to vector<8x512xi1>
    %92 = vector.broadcast %cst_56 : f32 to vector<8x512xf32>
    %93 = arith.select %91, %89, %92 : vector<8x512xi1>, vector<8x512xf32>
    %c0_57 = arith.constant 0 : index
    %c0_58 = arith.constant 0 : index
    %94 = vector.load %arg7[%c0_57, %c0_58] : memref<72x512xf32, #tpu.memory_space<vmem>>, vector<8x512xf32>
    tpu.vector_store %arg7[%c0_57, %c0_58], %93 {strides = array<i32>} : memref<72x512xf32, #tpu.memory_space<vmem>>, vector<8x512xf32>,
    %c0_59 = arith.constant 0 : index
    %c112_60 = arith.constant 112 : index
    %95 = vector.load %arg6[%c0_59, %c112_60] : memref<8x768xf32, #tpu.memory_space<vmem>>, vector<8x512xf32>
    %cst_61 = arith.constant 0.000000e+00 : f32
    %96 = vector.shape_cast %8 : vector<1x512xi1> to vector<1x512xi1>
    %97 = vector.broadcast %96 : vector<1x512xi1> to vector<8x512xi1>
    %98 = vector.broadcast %cst_61 : f32 to vector<8x512xf32>
    %99 = arith.select %97, %95, %98 : vector<8x512xi1>, vector<8x512xf32>
    %c8_62 = arith.constant 8 : index
    %c0_63 = arith.constant 0 : index
    %100 = vector.load %arg7[%c8_62, %c0_63] : memref<72x512xf32, #tpu.memory_space<vmem>>, vector<8x512xf32>
    tpu.vector_store %arg7[%c8_62, %c0_63], %99 {strides = array<i32>} : memref<72x512xf32, #tpu.memory_space<vmem>>, vector<8x512xf32>,
    %c0_64 = arith.constant 0 : index
    %c113_65 = arith.constant 113 : index
    %101 = vector.load %arg6[%c0_64, %c113_65] : memref<8x768xf32, #tpu.memory_space<vmem>>, vector<8x512xf32>
    %cst_66 = arith.constant 0.000000e+00 : f32
    %102 = vector.shape_cast %16 : vector<1x512xi1> to vector<1x512xi1>
    %103 = vector.broadcast %102 : vector<1x512xi1> to vector<8x512xi1>
    %104 = vector.broadcast %cst_66 : f32 to vector<8x512xf32>
    %105 = arith.select %103, %101, %104 : vector<8x512xi1>, vector<8x512xf32>
    %c16_67 = arith.constant 16 : index
    %c0_68 = arith.constant 0 : index
    %106 = vector.load %arg7[%c16_67, %c0_68] : memref<72x512xf32, #tpu.memory_space<vmem>>, vector<8x512xf32>
    tpu.vector_store %arg7[%c16_67, %c0_68], %105 {strides = array<i32>} : memref<72x512xf32, #tpu.memory_space<vmem>>, vector<8x512xf32>,
    %c0_69 = arith.constant 0 : index
    %c127_70 = arith.constant 127 : index
    %107 = vector.load %arg6[%c0_69, %c127_70] : memref<8x768xf32, #tpu.memory_space<vmem>>, vector<8x512xf32>
    %cst_71 = arith.constant 0.000000e+00 : f32
    %108 = vector.shape_cast %12 : vector<1x512xi1> to vector<1x512xi1>
    %109 = vector.broadcast %108 : vector<1x512xi1> to vector<8x512xi1>
    %110 = vector.broadcast %cst_71 : f32 to vector<8x512xf32>
    %111 = arith.select %109, %107, %110 : vector<8x512xi1>, vector<8x512xf32>
    %c24_72 = arith.constant 24 : index
    %c0_73 = arith.constant 0 : index
    %112 = vector.load %arg7[%c24_72, %c0_73] : memref<72x512xf32, #tpu.memory_space<vmem>>, vector<8x512xf32>
    tpu.vector_store %arg7[%c24_72, %c0_73], %111 {strides = array<i32>} : memref<72x512xf32, #tpu.memory_space<vmem>>, vector<8x512xf32>,
    %c0_74 = arith.constant 0 : index
    %c128_75 = arith.constant 128 : index
    %113 = vector.load %arg6[%c0_74, %c128_75] : memref<8x768xf32, #tpu.memory_space<vmem>>, vector<8x512xf32>
    %c32_76 = arith.constant 32 : index
    %c0_77 = arith.constant 0 : index
    %114 = vector.load %arg7[%c32_76, %c0_77] : memref<72x512xf32, #tpu.memory_space<vmem>>, vector<8x512xf32>
    tpu.vector_store %arg7[%c32_76, %c0_77], %113 {strides = array<i32>} : memref<72x512xf32, #tpu.memory_space<vmem>>, vector<8x512xf32>,
    %c0_78 = arith.constant 0 : index
    %c129_79 = arith.constant 129 : index
    %115 = vector.load %arg6[%c0_78, %c129_79] : memref<8x768xf32, #tpu.memory_space<vmem>>, vector<8x512xf32>
    %cst_80 = arith.constant 0.000000e+00 : f32
    %116 = vector.shape_cast %14 : vector<1x512xi1> to vector<1x512xi1>
    %117 = vector.broadcast %116 : vector<1x512xi1> to vector<8x512xi1>
    %118 = vector.broadcast %cst_80 : f32 to vector<8x512xf32>
    %119 = arith.select %117, %115, %118 : vector<8x512xi1>, vector<8x512xf32>
    %c40_81 = arith.constant 40 : index
    %c0_82 = arith.constant 0 : index
    %120 = vector.load %arg7[%c40_81, %c0_82] : memref<72x512xf32, #tpu.memory_space<vmem>>, vector<8x512xf32>
    tpu.vector_store %arg7[%c40_81, %c0_82], %119 {strides = array<i32>} : memref<72x512xf32, #tpu.memory_space<vmem>>, vector<8x512xf32>,
    %c0_83 = arith.constant 0 : index
    %c143_84 = arith.constant 143 : index
    %121 = vector.load %arg6[%c0_83, %c143_84] : memref<8x768xf32, #tpu.memory_space<vmem>>, vector<8x512xf32>
    %cst_85 = arith.constant 0.000000e+00 : f32
    %122 = vector.shape_cast %17 : vector<1x512xi1> to vector<1x512xi1>
    %123 = vector.broadcast %122 : vector<1x512xi1> to vector<8x512xi1>
    %124 = vector.broadcast %cst_85 : f32 to vector<8x512xf32>
    %125 = arith.select %123, %121, %124 : vector<8x512xi1>, vector<8x512xf32>
    %c48_86 = arith.constant 48 : index
    %c0_87 = arith.constant 0 : index
    %126 = vector.load %arg7[%c48_86, %c0_87] : memref<72x512xf32, #tpu.memory_space<vmem>>, vector<8x512xf32>
    tpu.vector_store %arg7[%c48_86, %c0_87], %125 {strides = array<i32>} : memref<72x512xf32, #tpu.memory_space<vmem>>, vector<8x512xf32>,
    %c0_88 = arith.constant 0 : index
    %c144_89 = arith.constant 144 : index
    %127 = vector.load %arg6[%c0_88, %c144_89] : memref<8x768xf32, #tpu.memory_space<vmem>>, vector<8x512xf32>
    %cst_90 = arith.constant 0.000000e+00 : f32
    %128 = vector.shape_cast %10 : vector<1x512xi1> to vector<1x512xi1>
    %129 = vector.broadcast %128 : vector<1x512xi1> to vector<8x512xi1>
    %130 = vector.broadcast %cst_90 : f32 to vector<8x512xf32>
    %131 = arith.select %129, %127, %130 : vector<8x512xi1>, vector<8x512xf32>
    %c56_91 = arith.constant 56 : index
    %c0_92 = arith.constant 0 : index
    %132 = vector.load %arg7[%c56_91, %c0_92] : memref<72x512xf32, #tpu.memory_space<vmem>>, vector<8x512xf32>
    tpu.vector_store %arg7[%c56_91, %c0_92], %131 {strides = array<i32>} : memref<72x512xf32, #tpu.memory_space<vmem>>, vector<8x512xf32>,
    %c0_93 = arith.constant 0 : index
    %c145_94 = arith.constant 145 : index
    %133 = vector.load %arg6[%c0_93, %c145_94] : memref<8x768xf32, #tpu.memory_space<vmem>>, vector<8x512xf32>
    %cst_95 = arith.constant 0.000000e+00 : f32
    %134 = vector.shape_cast %18 : vector<1x512xi1> to vector<1x512xi1>
    %135 = vector.broadcast %134 : vector<1x512xi1> to vector<8x512xi1>
    %136 = vector.broadcast %cst_95 : f32 to vector<8x512xf32>
    %137 = arith.select %135, %133, %136 : vector<8x512xi1>, vector<8x512xf32>
    %c64_96 = arith.constant 64 : index
    %c0_97 = arith.constant 0 : index
    %138 = vector.load %arg7[%c64_96, %c0_97] : memref<72x512xf32, #tpu.memory_space<vmem>>, vector<8x512xf32>
    tpu.vector_store %arg7[%c64_96, %c0_97], %137 {strides = array<i32>} : memref<72x512xf32, #tpu.memory_space<vmem>>, vector<8x512xf32>,
    %c0_98 = arith.constant 0 : index
    %c0_99 = arith.constant 0 : index
    %139 = vector.load %arg3[%c0_98, %c0_99] : memref<4x72xf32, #tpu.memory_space<vmem>>, vector<4x72xf32>
    %c0_100 = arith.constant 0 : index
    %c0_101 = arith.constant 0 : index
    %140 = vector.load %arg7[%c0_100, %c0_101] : memref<72x512xf32, #tpu.memory_space<vmem>>, vector<72x512xf32>
    %cst_102 = arith.constant dense<0.000000e+00> : vector<4x512xf32>
    %141 = tpu.matmul %139, %140, %cst_102 {dimension_numbers = #tpu.dot_dimension_numbers<[1], [0], [0], [1], [0, 0, 1, 1], [], []>} : vector<4x72xf32>, vector<72x512xf32>, vector<4x512xf32> -> vector<4x512xf32>
    %c0_103 = arith.constant 0 : index
    %c0_104 = arith.constant 0 : index
    %142 = vector.load %arg4[%c0_103, %c0_104] : memref<4x1xf32, #tpu.memory_space<vmem>>, vector<4x1xf32>
    %143 = vector.broadcast %142 : vector<4x1xf32> to vector<4x512xf32>
    %144 = arith.addf %141, %143 : vector<4x512xf32>
    %145 = vector.extract_strided_slice %144 {offsets = [0, 0], sizes = [4, 256], strides = [1, 1]} : vector<4x512xf32> to vector<4x256xf32>
    %c0_105 = arith.constant 0 : index
    %c0_106 = arith.constant 0 : index
    %c0_107 = arith.constant 0 : index
    %146 = vector.load %arg5[%c0_105, %c0_106, %c0_107] : memref<2x4x256xf32, #tpu.memory_space<vmem>>, vector<1x4x256xf32>
    %147 = vector.shape_cast %146 : vector<1x4x256xf32> to vector<4x256xf32>
    %148 = vector.shape_cast %145 : vector<4x256xf32> to vector<1x4x256xf32>
    tpu.vector_store %arg5[%c0_105, %c0_106, %c0_107], %148 {strides = array<i32>} : memref<2x4x256xf32, #tpu.memory_space<vmem>>, vector<1x4x256xf32>,
    %149 = vector.extract_strided_slice %144 {offsets = [0, 256], sizes = [4, 256], strides = [1, 1]} : vector<4x512xf32> to vector<4x256xf32>
    %c1_108 = arith.constant 1 : index
    %c0_109 = arith.constant 0 : index
    %c0_110 = arith.constant 0 : index
    %150 = vector.load %arg5[%c1_108, %c0_109, %c0_110] : memref<2x4x256xf32, #tpu.memory_space<vmem>>, vector<1x4x256xf32>
    %151 = vector.shape_cast %150 : vector<1x4x256xf32> to vector<4x256xf32>
    %152 = vector.shape_cast %149 : vector<4x256xf32> to vector<1x4x256xf32>
    tpu.vector_store %arg5[%c1_108, %c0_109, %c0_110], %152 {strides = array<i32>} : memref<2x4x256xf32, #tpu.memory_space<vmem>>, vector<1x4x256xf32>,
    return
  }
  func.func @transform_0(%arg0: i32) -> (i32, i32, i32) {
    %c0_i32 = arith.constant 0 : i32
    %c0_i32_0 = arith.constant 0 : i32
    %c0_i32_1 = arith.constant 0 : i32
    %c0_i32_2 = arith.constant 0 : i32
    return %c0_i32, %c0_i32_0, %c0_i32_1 : i32, i32, i32
  }
  func.func @transform_1(%arg0: i32) -> (i32, i32) {
    %c0_i32 = arith.constant 0 : i32
    %c0_i32_0 = arith.constant 0 : i32
    %c0_i32_1 = arith.constant 0 : i32
    return %c0_i32, %c0_i32_0 : i32, i32
  }
  func.func @transform_2(%arg0: i32) -> (i32, i32) {
    %c0_i32 = arith.constant 0 : i32
    %c0_i32_0 = arith.constant 0 : i32
    %c0_i32_1 = arith.constant 0 : i32
    return %c0_i32, %c0_i32_0 : i32, i32
  }
  func.func @transform_3(%arg0: i32) -> (i32, i32) {
    %c0_i32 = arith.constant 0 : i32
    %c0_i32_0 = arith.constant 0 : i32
    %c0_i32_1 = arith.constant 0 : i32
    return %c0_i32, %c0_i32_0 : i32, i32
  }
  func.func @transform_4(%arg0: i32) -> (i32, i32, i32) {
    %c0_i32 = arith.constant 0 : i32
    %c0_i32_0 = arith.constant 0 : i32
    %c0_i32_1 = arith.constant 0 : i32
    %c0_i32_2 = arith.constant 0 : i32
    return %c0_i32, %c0_i32_0, %c0_i32_1 : i32, i32, i32
  }
}

</mosaic_0001>

<llo_original>
// kernel: _fused_generator_forward.1
$region0: #{_fused_generator_forward.1}
  #allocation0 [shape = 'u32[]', space=smem, size = 0x4, offset = 0x4, fixed_abs, tag = 'smem constant byte address 0x4 - core index']
  #allocation1 [shape = 'u32[144,128]{1,0:T(1,128)}', space=vmem, size = 0x12000, scoped, tag = 'internal scratch']
  #allocation2 [shape = 'f32[8,768]{1,0:T(8,128)}', space=vmem, size = 0x6000, scoped, tag = 'scratch operand']
  #allocation3 [shape = 'f32[72,512]{1,0:T(8,128)}', space=vmem, size = 0x24000, scoped, tag = 'scratch operand']
  %s0 = inlined_call_operand.vmem [shape: f32[2,4,256], index: 0, kind: input, shape index: {}]
  %s1 = inlined_call_operand.vmem [shape: f32[8,72], index: 1, kind: input, shape index: {}]
  %s2 = inlined_call_operand.vmem [shape: f32[4,72], index: 2, kind: input, shape index: {}]
  %s3 = inlined_call_operand.vmem [shape: f32[4,1], index: 3, kind: input, shape index: {}]
  %s4 = inlined_call_operand.vmem [shape: f32[2,4,256], index: 4, kind: output, shape index: {}]
  %s5 = sld [smem:[#allocation0]]
  $region26: #{_fused_generator_forward.1} parent=0
    _
  %s7 = ssub.s32 1, %s5
  %s8 = scalar_select 0, %s7, %s5
  // Predicated region
  $region2: #{_fused_generator_forward.1} parent=0 // pred_check
    _
  $region3: #{_fused_generator_forward.1} parent=0 // pred_check_branch
    %10 = sbr.rel (0) target = $region5
  $region4: #{_fused_generator_forward.1} parent=0 // pred_region
    _
  $region5: #{_fused_generator_forward.1} parent=0 // pred_fallthru
    _
  // Predicated region
  $region6: #{_fused_generator_forward.1} parent=0 // pred_check
    _
  $region7: #{_fused_generator_forward.1} parent=0 // pred_check_branch
    %12 = sbr.rel (0) target = $region9
  $region8: #{_fused_generator_forward.1} parent=0 // pred_region
    _
  $region9: #{_fused_generator_forward.1} parent=0 // pred_fallthru
    _
  // Predicated region
  $region10: #{_fused_generator_forward.1} parent=0 // pred_check
    _
  $region11: #{_fused_generator_forward.1} parent=0 // pred_check_branch
    %14 = sbr.rel (0) target = $region13
  $region12: #{_fused_generator_forward.1} parent=0 // pred_region
    _
  $region13: #{_fused_generator_forward.1} parent=0 // pred_fallthru
    _
  // Predicated region
  $region14: #{_fused_generator_forward.1} parent=0 // pred_check
    _
  $region15: #{_fused_generator_forward.1} parent=0 // pred_check_branch
    %16 = sbr.rel (0) target = $region17
  $region16: #{_fused_generator_forward.1} parent=0 // pred_region
    _
  $region17: #{_fused_generator_forward.1} parent=0 // pred_fallthru
    _
  %v17 = vlaneseq
  %v18 = vand.u32 %v17, 127
  %v19 = vadd.s32 %v18, 128
  %v20 = vadd.s32 %v18, 256
  %v21 = vadd.s32 %v18, 384
  %v22 = vand.u32 %v18, 15
  %v23 = vand.u32 %v19, 15
  %v24 = vand.u32 %v20, 15
  %v25 = vand.u32 %v21, 15
  %v26 = vshra.s32 %v18, 4
  %v27 = vshra.s32 %v19, 4
  %v28 = vshra.s32 %v20, 4
  %v29 = vshra.s32 %v21, 4
  %v30 = vand.u32 %v26, 15
  %v31 = vand.u32 %v27, 15
  %v32 = vand.u32 %v28, 15
  %v33 = vand.u32 %v29, 15
  %vm34 = vcmp.ne.s32.totalorder %v30, 0
  %vm35 = vcmp.ne.s32.totalorder %v31, 0
  %vm36 = vcmp.ne.s32.totalorder %v32, 0
  %vm37 = vcmp.ne.s32.totalorder %v33, 0
  %vm38 = vcmp.ne.s32.totalorder %v30, 15
  %vm39 = vcmp.ne.s32.totalorder %v31, 15
  %vm40 = vcmp.ne.s32.totalorder %v32, 15
  %vm41 = vcmp.ne.s32.totalorder %v33, 15
  %vm42 = vcmp.ne.s32.totalorder %v22, 0
  %vm43 = vcmp.ne.s32.totalorder %v23, 0
  %vm44 = vcmp.ne.s32.totalorder %v24, 0
  %vm45 = vcmp.ne.s32.totalorder %v25, 0
  %vm46 = vcmp.ne.s32.totalorder %v22, 15
  %vm47 = vcmp.ne.s32.totalorder %v23, 15
  %vm48 = vcmp.ne.s32.totalorder %v24, 15
  %vm49 = vcmp.ne.s32.totalorder %v25, 15
  %vm50 = vmand %vm34, %vm42
  %vm51 = vmand %vm35, %vm43
  %vm52 = vmand %vm36, %vm44
  %vm53 = vmand %vm37, %vm45
  %vm54 = vmand %vm34, %vm46
  %vm55 = vmand %vm35, %vm47
  %vm56 = vmand %vm36, %vm48
  %vm57 = vmand %vm37, %vm49
  %vm58 = vmand %vm38, %vm42
  %vm59 = vmand %vm39, %vm43
  %vm60 = vmand %vm40, %vm44
  %vm61 = vmand %vm41, %vm45
  %vm62 = vmand %vm38, %vm46
  %vm63 = vmand %vm39, %vm47
  %vm64 = vmand %vm40, %vm48
  %vm65 = vmand %vm41, %vm49
  %66 = vst [vmem:[#allocation2] sm:$0xff] 0.0
  %67 = vst [vmem:[#allocation2 + $0x28] sm:$0xff] 0.0
  %v68 = vld [vmem:[%s0] sm:$0xff]
  %v70 = vcombine.high %v68, %v68
  %72 = vst [vmem:[#allocation2 + $0x8] sm:$0xf] %v68
  %73 = vst [vmem:[#allocation2 + $0x10] sm:$0xf] %v70
  %s74 = scalar_lea.vmem %s0, 8
  %v75 = vld [vmem:[%s74] sm:$0xff]
  %v77 = vcombine.high %v75, %v75
  %79 = vst [vmem:[#allocation2 + $0x18] sm:$0xf] %v75
  %80 = vst [vmem:[#allocation2 + $0x20] sm:$0xf] %v77
  %v81 = vlaneseq
  %vm82 = vcmp.ge.s32.totalorder %v81, 0
  %vm83 = vcmp.lt.s32.totalorder %v81, 512
  %vm84 = vmand %vm82, %vm83
  %s85 = scalar_lea.vmem [#allocation2], 12
  %86 = vst.msk [vmem:[%s85] ss:$8 sm:$0xf] %vm84, 1.0
  %87 = vst.msk [vmem:[%s85] ss:$8 sm:$0x0] %vm84, 1.0
  %88 = vst [vmem:[#allocation2 + $0x8] sm:$0xe0] 0.0
  %89 = vst [vmem:[#allocation2 + $0x10] sm:$0xe0] 0.0
  %90 = vst [vmem:[#allocation2 + $0x18] sm:$0xe0] 0.0
  %91 = vst [vmem:[#allocation2 + $0x20] sm:$0xe0] 0.0
  %v92 = vld [vmem:[#allocation2] sm:$0xff]
  %v93 = vld [vmem:[#allocation2 + $0x8] sm:$0xff]
  %v94 = vld [vmem:[#allocation2 + $0x10] sm:$0xff]
  %v95 = vld [vmem:[#allocation2 + $0x18] sm:$0xff]
  %v96 = vld [vmem:[#allocation2 + $0x20] sm:$0xff]
  %v97 = vsel %vm50, 1, 0
  %v98 = vsel %vm51, 1, 0
  %v99 = vsel %vm52, 1, 0
  %v100 = vsel %vm53, 1, 0
  %vm101 = vcmp.eq.s32.totalorder %v97, 1
  %vm102 = vcmp.eq.s32.totalorder %v98, 1
  %vm103 = vcmp.eq.s32.totalorder %v99, 1
  %vm104 = vcmp.eq.s32.totalorder %v100, 1
  %110 = vrot.lane.b32.xlu0 %v92, 17
  %v111 = vpop.permute.xlu0 %110
  %112 = vrot.lane.b32.xlu0 %v93, 17
  %v113 = vpop.permute.xlu0 %112
  %114 = vrot.lane.b32.xlu0 %v94, 17
  %v115 = vpop.permute.xlu0 %114
  %116 = vrot.lane.b32.xlu0 %v95, 17
  %v117 = vpop.permute.xlu0 %116
  %118 = vrot.lane.b32.xlu0 %v96, 17
  %v119 = vpop.permute.xlu0 %118
  %vm120 = vcmask 138240
  %v121 = vsel %vm120, %v111, %v113
  %v122 = vsel %vm120, %v113, %v115
  %v123 = vsel %vm120, %v115, %v117
  %v124 = vsel %vm120, %v117, %v119
  %v129 = vsel %vm101, %v121, 0.0
  %v130 = vsel %vm102, %v122, 0.0
  %v131 = vsel %vm103, %v123, 0.0
  %v132 = vsel %vm104, %v124, 0.0
  %133 = vst [vmem:[#allocation3] sm:$0xff] %v129
  %134 = vst [vmem:[#allocation3 + $0x8] sm:$0xff] %v130
  %135 = vst [vmem:[#allocation3 + $0x10] sm:$0xff] %v131
  %136 = vst [vmem:[#allocation3 + $0x18] sm:$0xff] %v132
  %v137 = vld [vmem:[#allocation2] sm:$0xff]
  %v138 = vld [vmem:[#allocation2 + $0x8] sm:$0xff]
  %v139 = vld [vmem:[#allocation2 + $0x10] sm:$0xff]
  %v140 = vld [vmem:[#allocation2 + $0x18] sm:$0xff]
  %v141 = vld [vmem:[#allocation2 + $0x20] sm:$0xff]
  %v142 = vsel %vm34, 1, 0
  %v143 = vsel %vm35, 1, 0
  %v144 = vsel %vm36, 1, 0
  %v145 = vsel %vm37, 1, 0
  %vm146 = vcmp.eq.s32.totalorder %v142, 1
  %vm147 = vcmp.eq.s32.totalorder %v143, 1
  %vm148 = vcmp.eq.s32.totalorder %v144, 1
  %vm149 = vcmp.eq.s32.totalorder %v145, 1
  %155 = vrot.lane.b32.xlu0 %v137, 16
  %v156 = vpop.permute.xlu0 %155
  %157 = vrot.lane.b32.xlu0 %v138, 16
  %v158 = vpop.permute.xlu0 %157
  %159 = vrot.lane.b32.xlu0 %v139, 16
  %v160 = vpop.permute.xlu0 %159
  %161 = vrot.lane.b32.xlu0 %v140, 16
  %v162 = vpop.permute.xlu0 %161
  %163 = vrot.lane.b32.xlu0 %v141, 16
  %v164 = vpop.permute.xlu0 %163
  %vm165 = vcmask 130048
  %v166 = vsel %vm165, %v156, %v158
  %v167 = vsel %vm165, %v158, %v160
  %v168 = vsel %vm165, %v160, %v162
  %v169 = vsel %vm165, %v162, %v164
  %v174 = vsel %vm146, %v166, 0.0
  %v175 = vsel %vm147, %v167, 0.0
  %v176 = vsel %vm148, %v168, 0.0
  %v177 = vsel %vm149, %v169, 0.0
  %178 = vst [vmem:[#allocation3 + $0x20] sm:$0xff] %v174
  %179 = vst [vmem:[#allocation3 + $0x28] sm:$0xff] %v175
  %180 = vst [vmem:[#allocation3 + $0x30] sm:$0xff] %v176
  %181 = vst [vmem:[#allocation3 + $0x38] sm:$0xff] %v177
  %v182 = vld [vmem:[#allocation2] sm:$0xff]
  %v183 = vld [vmem:[#allocation2 + $0x8] sm:$0xff]
  %v184 = vld [vmem:[#allocation2 + $0x10] sm:$0xff]
  %v185 = vld [vmem:[#allocation2 + $0x18] sm:$0xff]
  %v186 = vld [vmem:[#allocation2 + $0x20] sm:$0xff]
  %v187 = vsel %vm54, 1, 0
  %v188 = vsel %vm55, 1, 0
  %v189 = vsel %vm56, 1, 0
  %v190 = vsel %vm57, 1, 0
  %vm191 = vcmp.eq.s32.totalorder %v187, 1
  %vm192 = vcmp.eq.s32.totalorder %v188, 1
  %vm193 = vcmp.eq.s32.totalorder %v189, 1
  %vm194 = vcmp.eq.s32.totalorder %v190, 1
  %200 = vrot.lane.b32.xlu0 %v182, 15
  %v201 = vpop.permute.xlu0 %200
  %202 = vrot.lane.b32.xlu0 %v183, 15
  %v203 = vpop.permute.xlu0 %202
  %204 = vrot.lane.b32.xlu0 %v184, 15
  %v205 = vpop.permute.xlu0 %204
  %206 = vrot.lane.b32.xlu0 %v185, 15
  %v207 = vpop.permute.xlu0 %206
  %208 = vrot.lane.b32.xlu0 %v186, 15
  %v209 = vpop.permute.xlu0 %208
  %vm210 = vcmask 121856
  %v211 = vsel %vm210, %v201, %v203
  %v212 = vsel %vm210, %v203, %v205
  %v213 = vsel %vm210, %v205, %v207
  %v214 = vsel %vm210, %v207, %v209
  %v219 = vsel %vm191, %v211, 0.0
  %v220 = vsel %vm192, %v212, 0.0
  %v221 = vsel %vm193, %v213, 0.0
  %v222 = vsel %vm194, %v214, 0.0
  %223 = vst [vmem:[#allocation3 + $0x40] sm:$0xff] %v219
  %224 = vst [vmem:[#allocation3 + $0x48] sm:$0xff] %v220
  %225 = vst [vmem:[#allocation3 + $0x50] sm:$0xff] %v221
  %226 = vst [vmem:[#allocation3 + $0x58] sm:$0xff] %v222
  %v227 = vld [vmem:[#allocation2] sm:$0xff]
  %v228 = vld [vmem:[#allocation2 + $0x8] sm:$0xff]
  %v229 = vld [vmem:[#allocation2 + $0x10] sm:$0xff]
  %v230 = vld [vmem:[#allocation2 + $0x18] sm:$0xff]
  %v231 = vld [vmem:[#allocation2 + $0x20] sm:$0xff]
  %v232 = vsel %vm42, 1, 0
  %v233 = vsel %vm43, 1, 0
  %v234 = vsel %vm44, 1, 0
  %v235 = vsel %vm45, 1, 0
  %vm236 = vcmp.eq.s32.totalorder %v232, 1
  %vm237 = vcmp.eq.s32.totalorder %v233, 1
  %vm238 = vcmp.eq.s32.totalorder %v234, 1
  %vm239 = vcmp.eq.s32.totalorder %v235, 1
  %245 = vrot.lane.b32.xlu0 %v227, 1
  %v246 = vpop.permute.xlu0 %245
  %247 = vrot.lane.b32.xlu0 %v228, 1
  %v248 = vpop.permute.xlu0 %247
  %249 = vrot.lane.b32.xlu0 %v229, 1
  %v250 = vpop.permute.xlu0 %249
  %251 = vrot.lane.b32.xlu0 %v230, 1
  %v252 = vpop.permute.xlu0 %251
  %253 = vrot.lane.b32.xlu0 %v231, 1
  %v254 = vpop.permute.xlu0 %253
  %vm255 = vcmask 7168
  %v256 = vsel %vm255, %v246, %v248
  %v257 = vsel %vm255, %v248, %v250
  %v258 = vsel %vm255, %v250, %v252
  %v259 = vsel %vm255, %v252, %v254
  %v264 = vsel %vm236, %v256, 0.0
  %v265 = vsel %vm237, %v257, 0.0
  %v266 = vsel %vm238, %v258, 0.0
  %v267 = vsel %vm239, %v259, 0.0
  %268 = vst [vmem:[#allocation3 + $0x60] sm:$0xff] %v264
  %269 = vst [vmem:[#allocation3 + $0x68] sm:$0xff] %v265
  %270 = vst [vmem:[#allocation3 + $0x70] sm:$0xff] %v266
  %271 = vst [vmem:[#allocation3 + $0x78] sm:$0xff] %v267
  %v272 = vld [vmem:[#allocation2 + $0x8] sm:$0xff]
  %v273 = vld [vmem:[#allocation2 + $0x10] sm:$0xff]
  %v274 = vld [vmem:[#allocation2 + $0x18] sm:$0xff]
  %v275 = vld [vmem:[#allocation2 + $0x20] sm:$0xff]
  %276 = vst [vmem:[#allocation3 + $0x80] sm:$0xff] %v272
  %277 = vst [vmem:[#allocation3 + $0x88] sm:$0xff] %v273
  %278 = vst [vmem:[#allocation3 + $0x90] sm:$0xff] %v274
  %279 = vst [vmem:[#allocation3 + $0x98] sm:$0xff] %v275
  %v280 = vld [vmem:[#allocation2 + $0x8] sm:$0xff]
  %v281 = vld [vmem:[#allocation2 + $0x10] sm:$0xff]
  %v282 = vld [vmem:[#allocation2 + $0x18] sm:$0xff]
  %v283 = vld [vmem:[#allocation2 + $0x20] sm:$0xff]
  %v284 = vld [vmem:[#allocation2 + $0x28] sm:$0xff]
  %v285 = vsel %vm46, 1, 0
  %v286 = vsel %vm47, 1, 0
  %v287 = vsel %vm48, 1, 0
  %v288 = vsel %vm49, 1, 0
  %vm289 = vcmp.eq.s32.totalorder %v285, 1
  %vm290 = vcmp.eq.s32.totalorder %v286, 1
  %vm291 = vcmp.eq.s32.totalorder %v287, 1
  %vm292 = vcmp.eq.s32.totalorder %v288, 1
  %298 = vrot.lane.b32.xlu0 %v280, 127
  %v299 = vpop.permute.xlu0 %298
  %300 = vrot.lane.b32.xlu0 %v281, 127
  %v301 = vpop.permute.xlu0 %300
  %302 = vrot.lane.b32.xlu0 %v282, 127
  %v303 = vpop.permute.xlu0 %302
  %304 = vrot.lane.b32.xlu0 %v283, 127
  %v305 = vpop.permute.xlu0 %304
  %306 = vrot.lane.b32.xlu0 %v284, 127
  %v307 = vpop.permute.xlu0 %306
  %vm308 = vcmask 1039360
  %v309 = vsel %vm308, %v299, %v301
  %v310 = vsel %vm308, %v301, %v303
  %v311 = vsel %vm308, %v303, %v305
  %v312 = vsel %vm308, %v305, %v307
  %v317 = vsel %vm289, %v309, 0.0
  %v318 = vsel %vm290, %v310, 0.0
  %v319 = vsel %vm291, %v311, 0.0
  %v320 = vsel %vm292, %v312, 0.0
  %321 = vst [vmem:[#allocation3 + $0xa0] sm:$0xff] %v317
  %322 = vst [vmem:[#allocation3 + $0xa8] sm:$0xff] %v318
  %323 = vst [vmem:[#allocation3 + $0xb0] sm:$0xff] %v319
  %324 = vst [vmem:[#allocation3 + $0xb8] sm:$0xff] %v320
  %v325 = vld [vmem:[#allocation2 + $0x8] sm:$0xff]
  %v326 = vld [vmem:[#allocation2 + $0x10] sm:$0xff]
  %v327 = vld [vmem:[#allocation2 + $0x18] sm:$0xff]
  %v328 = vld [vmem:[#allocation2 + $0x20] sm:$0xff]
  %v329 = vld [vmem:[#allocation2 + $0x28] sm:$0xff]
  %v330 = vsel %vm58, 1, 0
  %v331 = vsel %vm59, 1, 0
  %v332 = vsel %vm60, 1, 0
  %v333 = vsel %vm61, 1, 0
  %vm334 = vcmp.eq.s32.totalorder %v330, 1
  %vm335 = vcmp.eq.s32.totalorder %v331, 1
  %vm336 = vcmp.eq.s32.totalorder %v332, 1
  %vm337 = vcmp.eq.s32.totalorder %v333, 1
  %343 = vrot.lane.b32.xlu0 %v325, 113
  %v344 = vpop.permute.xlu0 %343
  %345 = vrot.lane.b32.xlu0 %v326, 113
  %v346 = vpop.permute.xlu0 %345
  %347 = vrot.lane.b32.xlu0 %v327, 113
  %v348 = vpop.permute.xlu0 %347
  %349 = vrot.lane.b32.xlu0 %v328, 113
  %v350 = vpop.permute.xlu0 %349
  %351 = vrot.lane.b32.xlu0 %v329, 113
  %v352 = vpop.permute.xlu0 %351
  %vm353 = vcmask 924672
  %v354 = vsel %vm353, %v344, %v346
  %v355 = vsel %vm353, %v346, %v348
  %v356 = vsel %vm353, %v348, %v350
  %v357 = vsel %vm353, %v350, %v352
  %v362 = vsel %vm334, %v354, 0.0
  %v363 = vsel %vm335, %v355, 0.0
  %v364 = vsel %vm336, %v356, 0.0
  %v365 = vsel %vm337, %v357, 0.0
  %366 = vst [vmem:[#allocation3 + $0xc0] sm:$0xff] %v362
  %367 = vst [vmem:[#allocation3 + $0xc8] sm:$0xff] %v363
  %368 = vst [vmem:[#allocation3 + $0xd0] sm:$0xff] %v364
  %369 = vst [vmem:[#allocation3 + $0xd8] sm:$0xff] %v365
  %v370 = vld [vmem:[#allocation2 + $0x8] sm:$0xff]
  %v371 = vld [vmem:[#allocation2 + $0x10] sm:$0xff]
  %v372 = vld [vmem:[#allocation2 + $0x18] sm:$0xff]
  %v373 = vld [vmem:[#allocation2 + $0x20] sm:$0xff]
  %v374 = vld [vmem:[#allocation2 + $0x28] sm:$0xff]
  %v375 = vsel %vm38, 1, 0
  %v376 = vsel %vm39, 1, 0
  %v377 = vsel %vm40, 1, 0
  %v378 = vsel %vm41, 1, 0
  %vm379 = vcmp.eq.s32.totalorder %v375, 1
  %vm380 = vcmp.eq.s32.totalorder %v376, 1
  %vm381 = vcmp.eq.s32.totalorder %v377, 1
  %vm382 = vcmp.eq.s32.totalorder %v378, 1
  %388 = vrot.lane.b32.xlu0 %v370, 112
  %v389 = vpop.permute.xlu0 %388
  %390 = vrot.lane.b32.xlu0 %v371, 112
  %v391 = vpop.permute.xlu0 %390
  %392 = vrot.lane.b32.xlu0 %v372, 112
  %v393 = vpop.permute.xlu0 %392
  %394 = vrot.lane.b32.xlu0 %v373, 112
  %v395 = vpop.permute.xlu0 %394
  %396 = vrot.lane.b32.xlu0 %v374, 112
  %v397 = vpop.permute.xlu0 %396
  %vm398 = vcmask 916480
  %v399 = vsel %vm398, %v389, %v391
  %v400 = vsel %vm398, %v391, %v393
  %v401 = vsel %vm398, %v393, %v395
  %v402 = vsel %vm398, %v395, %v397
  %v407 = vsel %vm379, %v399, 0.0
  %v408 = vsel %vm380, %v400, 0.0
  %v409 = vsel %vm381, %v401, 0.0
  %v410 = vsel %vm382, %v402, 0.0
  %411 = vst [vmem:[#allocation3 + $0xe0] sm:$0xff] %v407
  %412 = vst [vmem:[#allocation3 + $0xe8] sm:$0xff] %v408
  %413 = vst [vmem:[#allocation3 + $0xf0] sm:$0xff] %v409
  %414 = vst [vmem:[#allocation3 + $0xf8] sm:$0xff] %v410
  %v415 = vld [vmem:[#allocation2 + $0x8] sm:$0xff]
  %v416 = vld [vmem:[#allocation2 + $0x10] sm:$0xff]
  %v417 = vld [vmem:[#allocation2 + $0x18] sm:$0xff]
  %v418 = vld [vmem:[#allocation2 + $0x20] sm:$0xff]
  %v419 = vld [vmem:[#allocation2 + $0x28] sm:$0xff]
  %v420 = vsel %vm62, 1, 0
  %v421 = vsel %vm63, 1, 0
  %v422 = vsel %vm64, 1, 0
  %v423 = vsel %vm65, 1, 0
  %vm424 = vcmp.eq.s32.totalorder %v420, 1
  %vm425 = vcmp.eq.s32.totalorder %v421, 1
  %vm426 = vcmp.eq.s32.totalorder %v422, 1
  %vm427 = vcmp.eq.s32.totalorder %v423, 1
  %433 = vrot.lane.b32.xlu0 %v415, 111
  %v434 = vpop.permute.xlu0 %433
  %435 = vrot.lane.b32.xlu0 %v416, 111
  %v436 = vpop.permute.xlu0 %435
  %437 = vrot.lane.b32.xlu0 %v417, 111
  %v438 = vpop.permute.xlu0 %437
  %439 = vrot.lane.b32.xlu0 %v418, 111
  %v440 = vpop.permute.xlu0 %439
  %441 = vrot.lane.b32.xlu0 %v419, 111
  %v442 = vpop.permute.xlu0 %441
  %vm443 = vcmask 908288
  %v444 = vsel %vm443, %v434, %v436
  %v445 = vsel %vm443, %v436, %v438
  %v446 = vsel %vm443, %v438, %v440
  %v447 = vsel %vm443, %v440, %v442
  %v452 = vsel %vm424, %v444, 0.0
  %v453 = vsel %vm425, %v445, 0.0
  %v454 = vsel %vm426, %v446, 0.0
  %v455 = vsel %vm427, %v447, 0.0
  %456 = vst [vmem:[#allocation3 + $0x100] sm:$0xff] %v452
  %457 = vst [vmem:[#allocation3 + $0x108] sm:$0xff] %v453
  %458 = vst [vmem:[#allocation3 + $0x110] sm:$0xff] %v454
  %459 = vst [vmem:[#allocation3 + $0x118] sm:$0xff] %v455
  %v460 = vld [vmem:[%s1] sm:$0xff]
  %v461 = vld [vmem:[#allocation3] sm:$0xff]
  %v462 = vld [vmem:[#allocation3 + $0x8] sm:$0xff]
  %v463 = vld [vmem:[#allocation3 + $0x10] sm:$0xff]
  %v464 = vld [vmem:[#allocation3 + $0x18] sm:$0xff]
  %v465 = vld [vmem:[#allocation3 + $0x20] sm:$0xff]
  %v466 = vld [vmem:[#allocation3 + $0x28] sm:$0xff]
  %v467 = vld [vmem:[#allocation3 + $0x30] sm:$0xff]
  %v468 = vld [vmem:[#allocation3 + $0x38] sm:$0xff]
  %v469 = vld [vmem:[#allocation3 + $0x40] sm:$0xff]
  %v470 = vld [vmem:[#allocation3 + $0x48] sm:$0xff]
  %v471 = vld [vmem:[#allocation3 + $0x50] sm:$0xff]
  %v472 = vld [vmem:[#allocation3 + $0x58] sm:$0xff]
  %v473 = vld [vmem:[#allocation3 + $0x60] sm:$0xff]
  %v474 = vld [vmem:[#allocation3 + $0x68] sm:$0xff]
  %v475 = vld [vmem:[#allocation3 + $0x70] sm:$0xff]
  %v476 = vld [vmem:[#allocation3 + $0x78] sm:$0xff]
  %v477 = vld [vmem:[#allocation3 + $0x80] sm:$0xff]
  %v478 = vld [vmem:[#allocation3 + $0x88] sm:$0xff]
  %v479 = vld [vmem:[#allocation3 + $0x90] sm:$0xff]
  %v480 = vld [vmem:[#allocation3 + $0x98] sm:$0xff]
  %v481 = vld [vmem:[#allocation3 + $0xa0] sm:$0xff]
  %v482 = vld [vmem:[#allocation3 + $0xa8] sm:$0xff]
  %v483 = vld [vmem:[#allocation3 + $0xb0] sm:$0xff]
  %v484 = vld [vmem:[#allocation3 + $0xb8] sm:$0xff]
  %v485 = vld [vmem:[#allocation3 + $0xc0] sm:$0xff]
  %v486 = vld [vmem:[#allocation3 + $0xc8] sm:$0xff]
  %v487 = vld [vmem:[#allocation3 + $0xd0] sm:$0xff]
  %v488 = vld [vmem:[#allocation3 + $0xd8] sm:$0xff]
  %v489 = vld [vmem:[#allocation3 + $0xe0] sm:$0xff]
  %v490 = vld [vmem:[#allocation3 + $0xe8] sm:$0xff]
  %v491 = vld [vmem:[#allocation3 + $0xf0] sm:$0xff]
  %v492 = vld [vmem:[#allocation3 + $0xf8] sm:$0xff]
  %v493 = vld [vmem:[#allocation3 + $0x100] sm:$0xff]
  %v494 = vld [vmem:[#allocation3 + $0x108] sm:$0xff]
  %v495 = vld [vmem:[#allocation3 + $0x110] sm:$0xff]
  %v496 = vld [vmem:[#allocation3 + $0x118] sm:$0xff]
  %vm497 = vcmask 588800
  %v499 = vsel %vm497, %v460, 0
  %501 = vmatprep.subr.mxu0 %v462
  %502 = vmatpush1.msra.mxu0 %v461
  %503 = vmatprep.subr.mxu0 %v466
  %504 = vmatpush1.msra.mxu0 %v465
  %505 = vmatprep.subr.mxu0 %v470
  %506 = vmatpush1.msra.mxu0 %v469
  %507 = vmatprep.subr.mxu0 %v474
  %508 = vmatpush1.msra.mxu0 %v473
  %509 = vmatprep.subr.mxu0 %v478
  %510 = vmatpush1.msra.mxu0 %v477
  %511 = vmatprep.subr.mxu0 %v482
  %512 = vmatpush1.msra.mxu0 %v481
  %513 = vmatprep.subr.mxu0 %v486
  %514 = vmatpush1.msra.mxu0 %v485
  %515 = vmatprep.subr.mxu0 %v490
  %516 = vmatpush1.msra.mxu0 %v489
  %517 = vmatprep.subr.mxu0 %v494
  %518 = vmatpush1.msra.mxu0 %v493
  %519 = vmatprep.subr.mxu0 0.0
  %520 = vmatpush1.msra.mxu0 0.0
  %521 = vmatprep.subr.mxu0 0.0
  %522 = vmatpush1.msra.mxu0 0.0
  %523 = vmatprep.subr.mxu0 0.0
  %524 = vmatpush1.msra.mxu0 0.0
  %525 = vmatprep.subr.mxu0 0.0
  %526 = vmatpush1.msra.mxu0 0.0
  %527 = vmatprep.subr.mxu0 0.0
  %528 = vmatpush1.msra.mxu0 0.0
  %529 = vmatprep.subr.mxu0 0.0
  %530 = vmatpush1.msra.mxu0 0.0
  %531 = vmatprep.subr.mxu0 0.0
  %532 = vmatpush1.msra.mxu0 0.0
  %533 = vmatprep.subr.mxu0 0.0
  %534 = vmatpush1.msra.mxu0 0.0
  %535 = vmatprep.subr.mxu0 0.0
  %536 = vmatpush1.msra.mxu0 0.0
  %537 = vmatprep.subr.mxu0 0.0
  %538 = vmatpush1.msra.mxu0 0.0
  %539 = vmatprep.subr.mxu0 0.0
  %540 = vmatpush1.msra.mxu0 0.0
  %541 = vmatprep.subr.mxu0 0.0
  %542 = vmatpush1.msra.mxu0 0.0
  %543 = vmatprep.subr.mxu0 0.0
  %544 = vmatpush1.msra.mxu0 0.0
  %545 = vmatprep.subr.mxu0 0.0
  %546 = vmatpush1.msra.mxu0 0.0
  %547 = vmatprep.subr.mxu0 0.0
  %548 = vmatpush1.msra.mxu0 0.0
  %549 = vmatprep.subr.mxu0 0.0
  %550 = vmatpush1.msra.mxu0 0.0
  %551 = vmatprep.subr.mxu0 0.0
  %552 = vmatpush1.msra.mxu0 0.0
  %553 = vmatprep.subr.mxu0 0.0
  %554 = vmatpush1.msra.mxu0 0.0
  %555 = vmatprep.subr.mxu0 0.0
  %556 = vmatpush1.msra.mxu0 0.0
  %557 = vmatprep.subr.mxu0 0.0
  %558 = vmatpush1.msra.mxu0 0.0
  %559 = vmatprep.subr.mxu0 0.0
  %560 = vmatpush1.msra.mxu0 0.0
  %561 = vmatprep.subr.mxu0 0.0
  %562 = vmatpush1.msra.mxu0 0.0
  %563 = vmatprep.subr.mxu0 0.0
  %564 = vmatpush1.msra.mxu0 0.0
  %565 = vmatprep.mubr.f32.mxu0 0.0
  %566 = vmatmul.mubr.f32.gmra.mrb[0].mxu0 %v499
  %v567 = vpop.f32.mrb[0].mxu0
  %v568 = vadd.f32 0.0, %v567
  %v569 = vpop.f32.mrb[0].mxu0
  %v570 = vadd.f32 0.0, %v569
  %571 = vdwg.mxu0
  %572 = vmatprep.subr.mxu0 %v464
  %573 = vmatpush1.msra.mxu0 %v463
  %574 = vmatprep.subr.mxu0 %v468
  %575 = vmatpush1.msra.mxu0 %v467
  %576 = vmatprep.subr.mxu0 %v472
  %577 = vmatpush1.msra.mxu0 %v471
  %578 = vmatprep.subr.mxu0 %v476
  %579 = vmatpush1.msra.mxu0 %v475
  %580 = vmatprep.subr.mxu0 %v480
  %581 = vmatpush1.msra.mxu0 %v479
  %582 = vmatprep.subr.mxu0 %v484
  %583 = vmatpush1.msra.mxu0 %v483
  %584 = vmatprep.subr.mxu0 %v488
  %585 = vmatpush1.msra.mxu0 %v487
  %586 = vmatprep.subr.mxu0 %v492
  %587 = vmatpush1.msra.mxu0 %v491
  %588 = vmatprep.subr.mxu0 %v496
  %589 = vmatpush1.msra.mxu0 %v495
  %590 = vmatprep.subr.mxu0 0.0
  %591 = vmatpush1.msra.mxu0 0.0
  %592 = vmatprep.subr.mxu0 0.0
  %593 = vmatpush1.msra.mxu0 0.0
  %594 = vmatprep.subr.mxu0 0.0
  %595 = vmatpush1.msra.mxu0 0.0
  %596 = vmatprep.subr.mxu0 0.0
  %597 = vmatpush1.msra.mxu0 0.0
  %598 = vmatprep.subr.mxu0 0.0
  %599 = vmatpush1.msra.mxu0 0.0
  %600 = vmatprep.subr.mxu0 0.0
  %601 = vmatpush1.msra.mxu0 0.0
  %602 = vmatprep.subr.mxu0 0.0
  %603 = vmatpush1.msra.mxu0 0.0
  %604 = vmatprep.subr.mxu0 0.0
  %605 = vmatpush1.msra.mxu0 0.0
  %606 = vmatprep.subr.mxu0 0.0
  %607 = vmatpush1.msra.mxu0 0.0
  %608 = vmatprep.subr.mxu0 0.0
  %609 = vmatpush1.msra.mxu0 0.0
  %610 = vmatprep.subr.mxu0 0.0
  %611 = vmatpush1.msra.mxu0 0.0
  %612 = vmatprep.subr.mxu0 0.0
  %613 = vmatpush1.msra.mxu0 0.0
  %614 = vmatprep.subr.mxu0 0.0
  %615 = vmatpush1.msra.mxu0 0.0
  %616 = vmatprep.subr.mxu0 0.0
  %617 = vmatpush1.msra.mxu0 0.0
  %618 = vmatprep.subr.mxu0 0.0
  %619 = vmatpush1.msra.mxu0 0.0
  %620 = vmatprep.subr.mxu0 0.0
  %621 = vmatpush1.msra.mxu0 0.0
  %622 = vmatprep.subr.mxu0 0.0
  %623 = vmatpush1.msra.mxu0 0.0
  %624 = vmatprep.subr.mxu0 0.0
  %625 = vmatpush1.msra.mxu0 0.0
  %626 = vmatprep.subr.mxu0 0.0
  %627 = vmatpush1.msra.mxu0 0.0
  %628 = vmatprep.subr.mxu0 0.0
  %629 = vmatpush1.msra.mxu0 0.0
  %630 = vmatprep.subr.mxu0 0.0
  %631 = vmatpush1.msra.mxu0 0.0
  %632 = vmatprep.subr.mxu0 0.0
  %633 = vmatpush1.msra.mxu0 0.0
  %634 = vmatprep.subr.mxu0 0.0
  %635 = vmatpush1.msra.mxu0 0.0
  %636 = vmatprep.mubr.f32.mxu0 0.0
  %637 = vmatmul.mubr.f32.gmra.mrb[0].mxu0 %v499
  %v638 = vpop.f32.mrb[0].mxu0
  %v639 = vadd.f32 0.0, %v638
  %v640 = vpop.f32.mrb[0].mxu0
  %v641 = vadd.f32 0.0, %v640
  %642 = vdwg.mxu0
  %v643 = vmax.f32 %v568, 0.0
  %v644 = vmax.f32 %v570, 0.0
  %v645 = vmax.f32 %v639, 0.0
  %v646 = vmax.f32 %v641, 0.0
  %647 = vst [vmem:[#allocation2 + $0x8] sm:$0xff] %v643
  %648 = vst [vmem:[#allocation2 + $0x10] sm:$0xff] %v644
  %649 = vst [vmem:[#allocation2 + $0x18] sm:$0xff] %v645
  %650 = vst [vmem:[#allocation2 + $0x20] sm:$0xff] %v646
  %v651 = vld [vmem:[#allocation2] sm:$0xff]
  %v652 = vld [vmem:[#allocation2 + $0x8] sm:$0xff]
  %v653 = vld [vmem:[#allocation2 + $0x10] sm:$0xff]
  %v654 = vld [vmem:[#allocation2 + $0x18] sm:$0xff]
  %v655 = vld [vmem:[#allocation2 + $0x20] sm:$0xff]
  %661 = vrot.lane.b32.xlu0 %v651, 17
  %v662 = vpop.permute.xlu0 %661
  %663 = vrot.lane.b32.xlu0 %v652, 17
  %v664 = vpop.permute.xlu0 %663
  %665 = vrot.lane.b32.xlu0 %v653, 17
  %v666 = vpop.permute.xlu0 %665
  %667 = vrot.lane.b32.xlu0 %v654, 17
  %v668 = vpop.permute.xlu0 %667
  %669 = vrot.lane.b32.xlu0 %v655, 17
  %v670 = vpop.permute.xlu0 %669
  %v671 = vsel %vm120, %v662, %v664
  %v672 = vsel %vm120, %v664, %v666
  %v673 = vsel %vm120, %v666, %v668
  %v674 = vsel %vm120, %v668, %v670
  %v679 = vsel %vm101, %v671, 0.0
  %v680 = vsel %vm102, %v672, 0.0
  %v681 = vsel %vm103, %v673, 0.0
  %v682 = vsel %vm104, %v674, 0.0
  %683 = vst [vmem:[#allocation3] sm:$0xff] %v679
  %684 = vst [vmem:[#allocation3 + $0x8] sm:$0xff] %v680
  %685 = vst [vmem:[#allocation3 + $0x10] sm:$0xff] %v681
  %686 = vst [vmem:[#allocation3 + $0x18] sm:$0xff] %v682
  %v687 = vld [vmem:[#allocation2] sm:$0xff]
  %v688 = vld [vmem:[#allocation2 + $0x8] sm:$0xff]
  %v689 = vld [vmem:[#allocation2 + $0x10] sm:$0xff]
  %v690 = vld [vmem:[#allocation2 + $0x18] sm:$0xff]
  %v691 = vld [vmem:[#allocation2 + $0x20] sm:$0xff]
  %697 = vrot.lane.b32.xlu0 %v687, 16
  %v698 = vpop.permute.xlu0 %697
  %699 = vrot.lane.b32.xlu0 %v688, 16
  %v700 = vpop.permute.xlu0 %699
  %701 = vrot.lane.b32.xlu0 %v689, 16
  %v702 = vpop.permute.xlu0 %701
  %703 = vrot.lane.b32.xlu0 %v690, 16
  %v704 = vpop.permute.xlu0 %703
  %705 = vrot.lane.b32.xlu0 %v691, 16
  %v706 = vpop.permute.xlu0 %705
  %v707 = vsel %vm165, %v698, %v700
  %v708 = vsel %vm165, %v700, %v702
  %v709 = vsel %vm165, %v702, %v704
  %v710 = vsel %vm165, %v704, %v706
  %v715 = vsel %vm146, %v707, 0.0
  %v716 = vsel %vm147, %v708, 0.0
  %v717 = vsel %vm148, %v709, 0.0
  %v718 = vsel %vm149, %v710, 0.0
  %719 = vst [vmem:[#allocation3 + $0x20] sm:$0xff] %v715
  %720 = vst [vmem:[#allocation3 + $0x28] sm:$0xff] %v716
  %721 = vst [vmem:[#allocation3 + $0x30] sm:$0xff] %v717
  %722 = vst [vmem:[#allocation3 + $0x38] sm:$0xff] %v718
  %v723 = vld [vmem:[#allocation2] sm:$0xff]
  %v724 = vld [vmem:[#allocation2 + $0x8] sm:$0xff]
  %v725 = vld [vmem:[#allocation2 + $0x10] sm:$0xff]
  %v726 = vld [vmem:[#allocation2 + $0x18] sm:$0xff]
  %v727 = vld [vmem:[#allocation2 + $0x20] sm:$0xff]
  %733 = vrot.lane.b32.xlu0 %v723, 15
  %v734 = vpop.permute.xlu0 %733
  %735 = vrot.lane.b32.xlu0 %v724, 15
  %v736 = vpop.permute.xlu0 %735
  %737 = vrot.lane.b32.xlu0 %v725, 15
  %v738 = vpop.permute.xlu0 %737
  %739 = vrot.lane.b32.xlu0 %v726, 15
  %v740 = vpop.permute.xlu0 %739
  %741 = vrot.lane.b32.xlu0 %v727, 15
  %v742 = vpop.permute.xlu0 %741
  %v743 = vsel %vm210, %v734, %v736
  %v744 = vsel %vm210, %v736, %v738
  %v745 = vsel %vm210, %v738, %v740
  %v746 = vsel %vm210, %v740, %v742
  %v751 = vsel %vm191, %v743, 0.0
  %v752 = vsel %vm192, %v744, 0.0
  %v753 = vsel %vm193, %v745, 0.0
  %v754 = vsel %vm194, %v746, 0.0
  %755 = vst [vmem:[#allocation3 + $0x40] sm:$0xff] %v751
  %756 = vst [vmem:[#allocation3 + $0x48] sm:$0xff] %v752
  %757 = vst [vmem:[#allocation3 + $0x50] sm:$0xff] %v753
  %758 = vst [vmem:[#allocation3 + $0x58] sm:$0xff] %v754
  %v759 = vld [vmem:[#allocation2] sm:$0xff]
  %v760 = vld [vmem:[#allocation2 + $0x8] sm:$0xff]
  %v761 = vld [vmem:[#allocation2 + $0x10] sm:$0xff]
  %v762 = vld [vmem:[#allocation2 + $0x18] sm:$0xff]
  %v763 = vld [vmem:[#allocation2 + $0x20] sm:$0xff]
  %769 = vrot.lane.b32.xlu0 %v759, 1
  %v770 = vpop.permute.xlu0 %769
  %771 = vrot.lane.b32.xlu0 %v760, 1
  %v772 = vpop.permute.xlu0 %771
  %773 = vrot.lane.b32.xlu0 %v761, 1
  %v774 = vpop.permute.xlu0 %773
  %775 = vrot.lane.b32.xlu0 %v762, 1
  %v776 = vpop.permute.xlu0 %775
  %777 = vrot.lane.b32.xlu0 %v763, 1
  %v778 = vpop.permute.xlu0 %777
  %v779 = vsel %vm255, %v770, %v772
  %v780 = vsel %vm255, %v772, %v774
  %v781 = vsel %vm255, %v774, %v776
  %v782 = vsel %vm255, %v776, %v778
  %v787 = vsel %vm236, %v779, 0.0
  %v788 = vsel %vm237, %v780, 0.0
  %v789 = vsel %vm238, %v781, 0.0
  %v790 = vsel %vm239, %v782, 0.0
  %791 = vst [vmem:[#allocation3 + $0x60] sm:$0xff] %v787
  %792 = vst [vmem:[#allocation3 + $0x68] sm:$0xff] %v788
  %793 = vst [vmem:[#allocation3 + $0x70] sm:$0xff] %v789
  %794 = vst [vmem:[#allocation3 + $0x78] sm:$0xff] %v790
  %v795 = vld [vmem:[#allocation2 + $0x8] sm:$0xff]
  %v796 = vld [vmem:[#allocation2 + $0x10] sm:$0xff]
  %v797 = vld [vmem:[#allocation2 + $0x18] sm:$0xff]
  %v798 = vld [vmem:[#allocation2 + $0x20] sm:$0xff]
  %799 = vst [vmem:[#allocation3 + $0x80] sm:$0xff] %v795
  %800 = vst [vmem:[#allocation3 + $0x88] sm:$0xff] %v796
  %801 = vst [vmem:[#allocation3 + $0x90] sm:$0xff] %v797
  %802 = vst [vmem:[#allocation3 + $0x98] sm:$0xff] %v798
  %v803 = vld [vmem:[#allocation2 + $0x8] sm:$0xff]
  %v804 = vld [vmem:[#allocation2 + $0x10] sm:$0xff]
  %v805 = vld [vmem:[#allocation2 + $0x18] sm:$0xff]
  %v806 = vld [vmem:[#allocation2 + $0x20] sm:$0xff]
  %v807 = vld [vmem:[#allocation2 + $0x28] sm:$0xff]
  %813 = vrot.lane.b32.xlu0 %v803, 127
  %v814 = vpop.permute.xlu0 %813
  %815 = vrot.lane.b32.xlu0 %v804, 127
  %v816 = vpop.permute.xlu0 %815
  %817 = vrot.lane.b32.xlu0 %v805, 127
  %v818 = vpop.permute.xlu0 %817
  %819 = vrot.lane.b32.xlu0 %v806, 127
  %v820 = vpop.permute.xlu0 %819
  %821 = vrot.lane.b32.xlu0 %v807, 127
  %v822 = vpop.permute.xlu0 %821
  %v823 = vsel %vm308, %v814, %v816
  %v824 = vsel %vm308, %v816, %v818
  %v825 = vsel %vm308, %v818, %v820
  %v826 = vsel %vm308, %v820, %v822
  %v831 = vsel %vm289, %v823, 0.0
  %v832 = vsel %vm290, %v824, 0.0
  %v833 = vsel %vm291, %v825, 0.0
  %v834 = vsel %vm292, %v826, 0.0
  %835 = vst [vmem:[#allocation3 + $0xa0] sm:$0xff] %v831
  %836 = vst [vmem:[#allocation3 + $0xa8] sm:$0xff] %v832
  %837 = vst [vmem:[#allocation3 + $0xb0] sm:$0xff] %v833
  %838 = vst [vmem:[#allocation3 + $0xb8] sm:$0xff] %v834
  %v839 = vld [vmem:[#allocation2 + $0x8] sm:$0xff]
  %v840 = vld [vmem:[#allocation2 + $0x10] sm:$0xff]
  %v841 = vld [vmem:[#allocation2 + $0x18] sm:$0xff]
  %v842 = vld [vmem:[#allocation2 + $0x20] sm:$0xff]
  %v843 = vld [vmem:[#allocation2 + $0x28] sm:$0xff]
  %849 = vrot.lane.b32.xlu0 %v839, 113
  %v850 = vpop.permute.xlu0 %849
  %851 = vrot.lane.b32.xlu0 %v840, 113
  %v852 = vpop.permute.xlu0 %851
  %853 = vrot.lane.b32.xlu0 %v841, 113
  %v854 = vpop.permute.xlu0 %853
  %855 = vrot.lane.b32.xlu0 %v842, 113
  %v856 = vpop.permute.xlu0 %855
  %857 = vrot.lane.b32.xlu0 %v843, 113
  %v858 = vpop.permute.xlu0 %857
  %v859 = vsel %vm353, %v850, %v852
  %v860 = vsel %vm353, %v852, %v854
  %v861 = vsel %vm353, %v854, %v856
  %v862 = vsel %vm353, %v856, %v858
  %v867 = vsel %vm334, %v859, 0.0
  %v868 = vsel %vm335, %v860, 0.0
  %v869 = vsel %vm336, %v861, 0.0
  %v870 = vsel %vm337, %v862, 0.0
  %871 = vst [vmem:[#allocation3 + $0xc0] sm:$0xff] %v867
  %872 = vst [vmem:[#allocation3 + $0xc8] sm:$0xff] %v868
  %873 = vst [vmem:[#allocation3 + $0xd0] sm:$0xff] %v869
  %874 = vst [vmem:[#allocation3 + $0xd8] sm:$0xff] %v870
  %v875 = vld [vmem:[#allocation2 + $0x8] sm:$0xff]
  %v876 = vld [vmem:[#allocation2 + $0x10] sm:$0xff]
  %v877 = vld [vmem:[#allocation2 + $0x18] sm:$0xff]
  %v878 = vld [vmem:[#allocation2 + $0x20] sm:$0xff]
  %v879 = vld [vmem:[#allocation2 + $0x28] sm:$0xff]
  %885 = vrot.lane.b32.xlu0 %v875, 112
  %v886 = vpop.permute.xlu0 %885
  %887 = vrot.lane.b32.xlu0 %v876, 112
  %v888 = vpop.permute.xlu0 %887
  %889 = vrot.lane.b32.xlu0 %v877, 112
  %v890 = vpop.permute.xlu0 %889
  %891 = vrot.lane.b32.xlu0 %v878, 112
  %v892 = vpop.permute.xlu0 %891
  %893 = vrot.lane.b32.xlu0 %v879, 112
  %v894 = vpop.permute.xlu0 %893
  %v895 = vsel %vm398, %v886, %v888
  %v896 = vsel %vm398, %v888, %v890
  %v897 = vsel %vm398, %v890, %v892
  %v898 = vsel %vm398, %v892, %v894
  %v903 = vsel %vm379, %v895, 0.0
  %v904 = vsel %vm380, %v896, 0.0
  %v905 = vsel %vm381, %v897, 0.0
  %v906 = vsel %vm382, %v898, 0.0
  %907 = vst [vmem:[#allocation3 + $0xe0] sm:$0xff] %v903
  %908 = vst [vmem:[#allocation3 + $0xe8] sm:$0xff] %v904
  %909 = vst [vmem:[#allocation3 + $0xf0] sm:$0xff] %v905
  %910 = vst [vmem:[#allocation3 + $0xf8] sm:$0xff] %v906
  %v911 = vld [vmem:[#allocation2 + $0x8] sm:$0xff]
  %v912 = vld [vmem:[#allocation2 + $0x10] sm:$0xff]
  %v913 = vld [vmem:[#allocation2 + $0x18] sm:$0xff]
  %v914 = vld [vmem:[#allocation2 + $0x20] sm:$0xff]
  %v915 = vld [vmem:[#allocation2 + $0x28] sm:$0xff]
  %921 = vrot.lane.b32.xlu0 %v911, 111
  %v922 = vpop.permute.xlu0 %921
  %923 = vrot.lane.b32.xlu0 %v912, 111
  %v924 = vpop.permute.xlu0 %923
  %925 = vrot.lane.b32.xlu0 %v913, 111
  %v926 = vpop.permute.xlu0 %925
  %927 = vrot.lane.b32.xlu0 %v914, 111
  %v928 = vpop.permute.xlu0 %927
  %929 = vrot.lane.b32.xlu0 %v915, 111
  %v930 = vpop.permute.xlu0 %929
  %v931 = vsel %vm443, %v922, %v924
  %v932 = vsel %vm443, %v924, %v926
  %v933 = vsel %vm443, %v926, %v928
  %v934 = vsel %vm443, %v928, %v930
  %v939 = vsel %vm424, %v931, 0.0
  %v940 = vsel %vm425, %v932, 0.0
  %v941 = vsel %vm426, %v933, 0.0
  %v942 = vsel %vm427, %v934, 0.0
  %943 = vst [vmem:[#allocation3 + $0x100] sm:$0xff] %v939
  %944 = vst [vmem:[#allocation3 + $0x108] sm:$0xff] %v940
  %945 = vst [vmem:[#allocation3 + $0x110] sm:$0xff] %v941
  %946 = vst [vmem:[#allocation3 + $0x118] sm:$0xff] %v942
  %v947 = vld [vmem:[%s2] sm:$0xf]
  %v948 = vld [vmem:[#allocation3] sm:$0xff]
  %v949 = vld [vmem:[#allocation3 + $0x8] sm:$0xff]
  %v950 = vld [vmem:[#allocation3 + $0x10] sm:$0xff]
  %v951 = vld [vmem:[#allocation3 + $0x18] sm:$0xff]
  %v952 = vld [vmem:[#allocation3 + $0x20] sm:$0xff]
  %v953 = vld [vmem:[#allocation3 + $0x28] sm:$0xff]
  %v954 = vld [vmem:[#allocation3 + $0x30] sm:$0xff]
  %v955 = vld [vmem:[#allocation3 + $0x38] sm:$0xff]
  %v956 = vld [vmem:[#allocation3 + $0x40] sm:$0xff]
  %v957 = vld [vmem:[#allocation3 + $0x48] sm:$0xff]
  %v958 = vld [vmem:[#allocation3 + $0x50] sm:$0xff]
  %v959 = vld [vmem:[#allocation3 + $0x58] sm:$0xff]
  %v960 = vld [vmem:[#allocation3 + $0x60] sm:$0xff]
  %v961 = vld [vmem:[#allocation3 + $0x68] sm:$0xff]
  %v962 = vld [vmem:[#allocation3 + $0x70] sm:$0xff]
  %v963 = vld [vmem:[#allocation3 + $0x78] sm:$0xff]
  %v964 = vld [vmem:[#allocation3 + $0x80] sm:$0xff]
  %v965 = vld [vmem:[#allocation3 + $0x88] sm:$0xff]
  %v966 = vld [vmem:[#allocation3 + $0x90] sm:$0xff]
  %v967 = vld [vmem:[#allocation3 + $0x98] sm:$0xff]
  %v968 = vld [vmem:[#allocation3 + $0xa0] sm:$0xff]
  %v969 = vld [vmem:[#allocation3 + $0xa8] sm:$0xff]
  %v970 = vld [vmem:[#allocation3 + $0xb0] sm:$0xff]
  %v971 = vld [vmem:[#allocation3 + $0xb8] sm:$0xff]
  %v972 = vld [vmem:[#allocation3 + $0xc0] sm:$0xff]
  %v973 = vld [vmem:[#allocation3 + $0xc8] sm:$0xff]
  %v974 = vld [vmem:[#allocation3 + $0xd0] sm:$0xff]
  %v975 = vld [vmem:[#allocation3 + $0xd8] sm:$0xff]
  %v976 = vld [vmem:[#allocation3 + $0xe0] sm:$0xff]
  %v977 = vld [vmem:[#allocation3 + $0xe8] sm:$0xff]
  %v978 = vld [vmem:[#allocation3 + $0xf0] sm:$0xff]
  %v979 = vld [vmem:[#allocation3 + $0xf8] sm:$0xff]
  %v980 = vld [vmem:[#allocation3 + $0x100] sm:$0xff]
  %v981 = vld [vmem:[#allocation3 + $0x108] sm:$0xff]
  %v982 = vld [vmem:[#allocation3 + $0x110] sm:$0xff]
  %v983 = vld [vmem:[#allocation3 + $0x118] sm:$0xff]
  %v984 = vld [vmem:[%s3] sm:$0xf]
  %986 = vset.pattern.permute.xlu0 0
  %987 = vperm.xlu0 %986, %v984
  %v988 = vpop.permute.xlu0 %987
  %v991 = vsel %vm497, %v947, 0
  %993 = vmatprep.subr.mxu0 %v949
  %994 = vmatpush1.msra.mxu0 %v948
  %995 = vmatprep.subr.mxu0 %v953
  %996 = vmatpush1.msra.mxu0 %v952
  %997 = vmatprep.subr.mxu0 %v957
  %998 = vmatpush1.msra.mxu0 %v956
  %999 = vmatprep.subr.mxu0 %v961
  %1000 = vmatpush1.msra.mxu0 %v960
  %1001 = vmatprep.subr.mxu0 %v965
  %1002 = vmatpush1.msra.mxu0 %v964
  %1003 = vmatprep.subr.mxu0 %v969
  %1004 = vmatpush1.msra.mxu0 %v968
  %1005 = vmatprep.subr.mxu0 %v973
  %1006 = vmatpush1.msra.mxu0 %v972
  %1007 = vmatprep.subr.mxu0 %v977
  %1008 = vmatpush1.msra.mxu0 %v976
  %1009 = vmatprep.subr.mxu0 %v981
  %1010 = vmatpush1.msra.mxu0 %v980
  %1011 = vmatprep.subr.mxu0 0.0
  %1012 = vmatpush1.msra.mxu0 0.0
  %1013 = vmatprep.subr.mxu0 0.0
  %1014 = vmatpush1.msra.mxu0 0.0
  %1015 = vmatprep.subr.mxu0 0.0
  %1016 = vmatpush1.msra.mxu0 0.0
  %1017 = vmatprep.subr.mxu0 0.0
  %1018 = vmatpush1.msra.mxu0 0.0
  %1019 = vmatprep.subr.mxu0 0.0
  %1020 = vmatpush1.msra.mxu0 0.0
  %1021 = vmatprep.subr.mxu0 0.0
  %1022 = vmatpush1.msra.mxu0 0.0
  %1023 = vmatprep.subr.mxu0 0.0
  %1024 = vmatpush1.msra.mxu0 0.0
  %1025 = vmatprep.subr.mxu0 0.0
  %1026 = vmatpush1.msra.mxu0 0.0
  %1027 = vmatprep.subr.mxu0 0.0
  %1028 = vmatpush1.msra.mxu0 0.0
  %1029 = vmatprep.subr.mxu0 0.0
  %1030 = vmatpush1.msra.mxu0 0.0
  %1031 = vmatprep.subr.mxu0 0.0
  %1032 = vmatpush1.msra.mxu0 0.0
  %1033 = vmatprep.subr.mxu0 0.0
  %1034 = vmatpush1.msra.mxu0 0.0
  %1035 = vmatprep.subr.mxu0 0.0
  %1036 = vmatpush1.msra.mxu0 0.0
  %1037 = vmatprep.subr.mxu0 0.0
  %1038 = vmatpush1.msra.mxu0 0.0
  %1039 = vmatprep.subr.mxu0 0.0
  %1040 = vmatpush1.msra.mxu0 0.0
  %1041 = vmatprep.subr.mxu0 0.0
  %1042 = vmatpush1.msra.mxu0 0.0
  %1043 = vmatprep.subr.mxu0 0.0
  %1044 = vmatpush1.msra.mxu0 0.0
  %1045 = vmatprep.subr.mxu0 0.0
  %1046 = vmatpush1.msra.mxu0 0.0
  %1047 = vmatprep.subr.mxu0 0.0
  %1048 = vmatpush1.msra.mxu0 0.0
  %1049 = vmatprep.subr.mxu0 0.0
  %1050 = vmatpush1.msra.mxu0 0.0
  %1051 = vmatprep.subr.mxu0 0.0
  %1052 = vmatpush1.msra.mxu0 0.0
  %1053 = vmatprep.subr.mxu0 0.0
  %1054 = vmatpush1.msra.mxu0 0.0
  %1055 = vmatprep.subr.mxu0 0.0
  %1056 = vmatpush1.msra.mxu0 0.0
  %1057 = vmatprep.mubr.f32.mxu0 0.0
  %1058 = vmatmul.mubr.f32.gmra.mrb[0].mxu0 %v991
  %v1059 = vpop.f32.mrb[0].mxu0
  %v1060 = vadd.f32 %v988, %v1059
  %v1061 = vpop.f32.mrb[0].mxu0
  %v1062 = vadd.f32 %v988, %v1061
  %1063 = vdwg.mxu0
  %1064 = vmatprep.subr.mxu0 %v951
  %1065 = vmatpush1.msra.mxu0 %v950
  %1066 = vmatprep.subr.mxu0 %v955
  %1067 = vmatpush1.msra.mxu0 %v954
  %1068 = vmatprep.subr.mxu0 %v959
  %1069 = vmatpush1.msra.mxu0 %v958
  %1070 = vmatprep.subr.mxu0 %v963
  %1071 = vmatpush1.msra.mxu0 %v962
  %1072 = vmatprep.subr.mxu0 %v967
  %1073 = vmatpush1.msra.mxu0 %v966
  %1074 = vmatprep.subr.mxu0 %v971
  %1075 = vmatpush1.msra.mxu0 %v970
  %1076 = vmatprep.subr.mxu0 %v975
  %1077 = vmatpush1.msra.mxu0 %v974
  %1078 = vmatprep.subr.mxu0 %v979
  %1079 = vmatpush1.msra.mxu0 %v978
  %1080 = vmatprep.subr.mxu0 %v983
  %1081 = vmatpush1.msra.mxu0 %v982
  %1082 = vmatprep.subr.mxu0 0.0
  %1083 = vmatpush1.msra.mxu0 0.0
  %1084 = vmatprep.subr.mxu0 0.0
  %1085 = vmatpush1.msra.mxu0 0.0
  %1086 = vmatprep.subr.mxu0 0.0
  %1087 = vmatpush1.msra.mxu0 0.0
  %1088 = vmatprep.subr.mxu0 0.0
  %1089 = vmatpush1.msra.mxu0 0.0
  %1090 = vmatprep.subr.mxu0 0.0
  %1091 = vmatpush1.msra.mxu0 0.0
  %1092 = vmatprep.subr.mxu0 0.0
  %1093 = vmatpush1.msra.mxu0 0.0
  %1094 = vmatprep.subr.mxu0 0.0
  %1095 = vmatpush1.msra.mxu0 0.0
  %1096 = vmatprep.subr.mxu0 0.0
  %1097 = vmatpush1.msra.mxu0 0.0
  %1098 = vmatprep.subr.mxu0 0.0
  %1099 = vmatpush1.msra.mxu0 0.0
  %1100 = vmatprep.subr.mxu0 0.0
  %1101 = vmatpush1.msra.mxu0 0.0
  %1102 = vmatprep.subr.mxu0 0.0
  %1103 = vmatpush1.msra.mxu0 0.0
  %1104 = vmatprep.subr.mxu0 0.0
  %1105 = vmatpush1.msra.mxu0 0.0
  %1106 = vmatprep.subr.mxu0 0.0
  %1107 = vmatpush1.msra.mxu0 0.0
  %1108 = vmatprep.subr.mxu0 0.0
  %1109 = vmatpush1.msra.mxu0 0.0
  %1110 = vmatprep.subr.mxu0 0.0
  %1111 = vmatpush1.msra.mxu0 0.0
  %1112 = vmatprep.subr.mxu0 0.0
  %1113 = vmatpush1.msra.mxu0 0.0
  %1114 = vmatprep.subr.mxu0 0.0
  %1115 = vmatpush1.msra.mxu0 0.0
  %1116 = vmatprep.subr.mxu0 0.0
  %1117 = vmatpush1.msra.mxu0 0.0
  %1118 = vmatprep.subr.mxu0 0.0
  %1119 = vmatpush1.msra.mxu0 0.0
  %1120 = vmatprep.subr.mxu0 0.0
  %1121 = vmatpush1.msra.mxu0 0.0
  %1122 = vmatprep.subr.mxu0 0.0
  %1123 = vmatpush1.msra.mxu0 0.0
  %1124 = vmatprep.subr.mxu0 0.0
  %1125 = vmatpush1.msra.mxu0 0.0
  %1126 = vmatprep.subr.mxu0 0.0
  %1127 = vmatpush1.msra.mxu0 0.0
  %1128 = vmatprep.mubr.f32.mxu0 0.0
  %1129 = vmatmul.mubr.f32.gmra.mrb[0].mxu0 %v991
  %v1130 = vpop.f32.mrb[0].mxu0
  %v1131 = vadd.f32 %v988, %v1130
  %v1132 = vpop.f32.mrb[0].mxu0
  %v1133 = vadd.f32 %v988, %v1132
  %1134 = vdwg.mxu0
  %v1137 = vcombine.low %v1060, %v1062
  %1139 = vst [vmem:[%s4] sm:$0xff] %v1137
  %v1142 = vcombine.low %v1131, %v1133
  %s1144 = scalar_lea.vmem %s4, 8
  %1145 = vst [vmem:[%s1144] sm:$0xff] %v1142
  // Predicated region
  $region18: #{_fused_generator_forward.1} parent=0 // pred_check
    _
  $region19: #{_fused_generator_forward.1} parent=0 // pred_check_branch
    %1147 = sbr.rel (0) target = $region21
  $region20: #{_fused_generator_forward.1} parent=0 // pred_region
    _
  $region21: #{_fused_generator_forward.1} parent=0 // pred_fallthru
    _
  // Predicated region
  $region22: #{_fused_generator_forward.1} parent=0 // pred_check
    _
  $region23: #{_fused_generator_forward.1} parent=0 // pred_check_branch
    %1149 = sbr.rel (0) target = $region25
  $region24: #{_fused_generator_forward.1} parent=0 // pred_region
    _
  $region25: #{_fused_generator_forward.1} parent=0 // pred_fallthru
    _

</llo_original>
